<compile_context>
chip_gen: v6e
topology: v6e:2x2x1
jax: 0.10.0
libtpu: 0.0.40
codegen_flags: <defaults>
</compile_context>

<pallas_src>
import functools

import jax
import jax.numpy as jnp
from jax import lax
from jax.experimental import pallas as pl
from jax.experimental.pallas import tpu as pltpu


def _round_up(x, m):
    return ((x + m - 1) // m) * m


def _postprocess_kernel(x_ref, sv_ref, si_ref, mi_ref, acc_v_ref, acc_i_ref,
                        *, top_k, n_true, sub_rows, pad_k):
    """One grid step = (batch row b, anchor-chunk j).

    x_ref : (C, sub_rows, 128)   scores; anchors lane-dense, classes vreg-major
    sv_ref: (1, pad_k)           top-k scores          (written on last chunk)
    si_ref: (1, pad_k) f32       top-k anchor indices  (written on last chunk)
    mi_ref: (sub_rows, 128) f32  per-anchor argmax class (written every chunk)
    acc_*_ref: VMEM (1, pad_k) f32 running top-k (values / global indices),
               resident across the chunk axis.
    """
    j = pl.program_id(1)
    chunk = sub_rows * 128
    num_classes = x_ref.shape[0]
    neg_inf = jnp.float32(-jnp.inf)
    pos_inf = jnp.float32(jnp.inf)

    # ---- init the running top-k on the first anchor chunk -------------------
    @pl.when(j == 0)
    def _init():
        acc_v_ref[...] = jnp.full((1, pad_k), neg_inf, jnp.float32)
        acc_i_ref[...] = jnp.full((1, pad_k), -1.0, jnp.float32)

    # ---- class max / argmax: streaming dense compare/select chain -----------
    # Classes are on the vreg-major axis, so the reduction is pure VPU work on
    # full (sub_rows, 128) vregs; slices are loaded one class at a time so the
    # live value never grows with the class count.  bf16 stays bf16 here
    # (native VALU on v6e/v7x; v5e pays a conversion either way).
    in_dt = x_ref.dtype
    chain_dt = in_dt if in_dt in (jnp.dtype(jnp.float32),
                                  jnp.dtype(jnp.bfloat16)) else jnp.float32

    def cls_body(c, carry):
        wv, wi = carry
        xc = x_ref[c].astype(chain_dt)
        upd = xc > wv                               # strict > = first occurrence
        return jnp.where(upd, xc, wv), jnp.where(upd, c, wi)

    win_v, win_i = lax.fori_loop(
        1, num_classes, cls_body,
        (x_ref[0].astype(chain_dt), jnp.zeros((sub_rows, 128), jnp.int32)),
        unroll=(num_classes <= 32))

    mi_ref[...] = win_i.astype(jnp.float32)
    win_v = win_v.astype(jnp.float32)

    # ---- chunk candidates: dense values + global anchor indices -------------
    row_i = lax.broadcasted_iota(jnp.int32, (sub_rows, 128), 0)
    lane_i = lax.broadcasted_iota(jnp.int32, (sub_rows, 128), 1)
    g_idx = j * chunk + row_i * 128 + lane_i
    # Mask padded / out-of-range anchors; clamp NaN winners to -inf so the
    # value-match selection below stays well defined.
    ok = (g_idx < n_true) & jnp.logical_not(jnp.isnan(win_v))
    cand_v = jnp.where(ok, win_v, neg_inf)          # (sub_rows, 128)
    cand_i = g_idx.astype(jnp.float32)              # exact for N < 2**24

    # ---- merge this chunk into the running top-k, fully in registers --------
    lane_k = lax.broadcasted_iota(jnp.int32, (1, pad_k), 1)
    acc_v = acc_v_ref[...]
    acc_i = acc_i_ref[...]

    def _max2(a):   # full max -> (1, 1), staying rank-2 throughout
        return jnp.max(jnp.max(a, axis=1, keepdims=True), axis=0, keepdims=True)

    def _min2(a):   # full min -> (1, 1)
        return jnp.min(jnp.min(a, axis=1, keepdims=True), axis=0, keepdims=True)

    def merge_body(k, carry):
        cv, av, nv, ni = carry
        cm = jnp.maximum(_max2(cv), _max2(av))                        # (1, 1)
        # smallest global index among the maxima (matches lax.top_k ties;
        # accumulator entries always carry smaller indices than the chunk)
        sel = jnp.minimum(
            _min2(jnp.where(av == cm, acc_i, pos_inf)),
            _min2(jnp.where(cv == cm, cand_i, pos_inf)))
        hit = lane_k == k
        nv = jnp.where(hit, cm, nv)
        ni = jnp.where(hit, sel, ni)
        # knock out exactly the selected candidate with a single select
        cv = jnp.where(cand_i == sel, neg_inf, cv)
        av = jnp.where(acc_i == sel, neg_inf, av)
        return cv, av, nv, ni

    init = (cand_v, acc_v,
            jnp.full((1, pad_k), neg_inf, jnp.float32),
            jnp.full((1, pad_k), -1.0, jnp.float32))
    _, _, new_v, new_i = lax.fori_loop(0, top_k, merge_body, init,
                                       unroll=(top_k <= 16))

    # single scratch write per chunk (no per-k one-lane stores)
    acc_v_ref[...] = new_v
    acc_i_ref[...] = new_i

    # ---- finalize: one lane-dense store of the padded top-k -----------------
    @pl.when(j == pl.num_programs(1) - 1)
    def _finalize():
        sv_ref[...] = acc_v_ref[...].astype(sv_ref.dtype)
        si_ref[...] = acc_i_ref[...]


def post_process(cls_score_list, top_k):
    """Pallas equivalent of PostProcess(top_k).forward(cls_score_list)."""
    B, N, C = cls_score_list.shape
    if not (0 < top_k <= N):
        raise ValueError("top_k must satisfy 0 < top_k <= num_anchors")

    rows_total = -(-N // 128)                 # anchor rows of 128 lanes
    pad_n = rows_total * 128
    pad_k = _round_up(top_k, 128)             # lane-dense padded top-k width

    # Chunk: up to 8192 anchors (64 rows) per grid step, shrunk for very large
    # class counts so a double-buffered input block stays ~<= 4 MiB.
    itemsize = jnp.dtype(cls_score_list.dtype).itemsize
    bytes_per_row = C * 128 * itemsize
    cap = min(64, max(8, ((4 * 1024 * 1024) // bytes_per_row) // 8 * 8))
    sub_rows = rows_total if rows_total <= cap else cap
    num_chunks = -(-rows_total // sub_rows)

    # Single fused relayout pass (transpose [+ pad only if needed]); the final
    # reshape is layout-preserving and therefore free.
    x = jnp.transpose(cls_score_list, (0, 2, 1))            # (B, C, N)
    if pad_n != N:
        x = jnp.pad(x, ((0, 0), (0, 0), (0, pad_n - N)))
    x = x.reshape(B, C, rows_total, 128)

    kernel = functools.partial(_postprocess_kernel, top_k=top_k, n_true=N,
                               sub_rows=sub_rows, pad_k=pad_k)

    sv, si, mi = pl.pallas_call(
        kernel,
        out_shape=(
            jax.ShapeDtypeStruct((B, 1, pad_k), cls_score_list.dtype),  # scores
            jax.ShapeDtypeStruct((B, 1, pad_k), jnp.float32),           # indices
            jax.ShapeDtypeStruct((B, rows_total, 128), jnp.float32),    # argmax
        ),
        grid_spec=pltpu.PrefetchScalarGridSpec(
            num_scalar_prefetch=0,
            grid=(B, num_chunks),
            in_specs=[pl.BlockSpec((None, C, sub_rows, 128),
                                   lambda b, j: (b, 0, j, 0))],
            out_specs=(
                pl.BlockSpec((None, 1, pad_k), lambda b, j: (b, 0, 0)),
                pl.BlockSpec((None, 1, pad_k), lambda b, j: (b, 0, 0)),
                pl.BlockSpec((None, sub_rows, 128), lambda b, j: (b, j, 0)),
            ),
            scratch_shapes=[
                pltpu.VMEM((1, pad_k), jnp.float32),   # running top-k values
                pltpu.VMEM((1, pad_k), jnp.float32),   # running top-k indices
            ],
        ),
        compiler_params=pltpu.CompilerParams(
            dimension_semantics=("parallel", "arbitrary"),
            vmem_limit_bytes=32 * 1024 * 1024,
        ),
    )(x)

    sorted_scores = sv[:, 0, :top_k]
    sorted_index = si[:, 0, :top_k]
    max_index = mi.reshape(B, pad_n)[:, :N]
    return sorted_scores, sorted_index, max_index


def _reference(x, top_k):
    max_scores = jnp.max(x, axis=-1)
    max_index = jnp.argmax(x, axis=-1).astype(jnp.float32)
    vals, idx = lax.top_k(max_scores, top_k)
    return vals, idx.astype(jnp.float32), max_index


def _check(key, B, N, C, top_k):
    x = jax.random.normal(key, (B, N, C), dtype=jnp.float32)
    got = post_process(x, top_k)
    jax.block_until_ready(got)
    want = _reference(x, top_k)
    assert jnp.allclose(got[0], want[0], atol=1e-6), "top-k scores mismatch"
    assert jnp.array_equal(got[1], want[1]), "top-k indices mismatch"
    assert jnp.array_equal(got[2], want[2]), "argmax class mismatch"


if __name__ == "__main__":
    key = jax.random.PRNGKey(0)
    k0, k1, k2 = jax.random.split(key, 3)

    # primary small example (matches the module's intended use)
    _check(k0, B=2, N=128, C=16, top_k=8)
    # non-multiple-of-128 anchor count + tiny class count
    _check(k1, B=2, N=200, C=7, top_k=5)
    # multi-chunk accumulator path (2 chunks) + larger, non-unrolled top_k
    _check(k2, B=1, N=8832, C=21, top_k=77)

    print("KERNEL_OK")
</pallas_src>

<mosaic_0001>
module attributes {stable_mosaic.version = 11 : i64} {
  func.func @_postprocess_kernel(%arg0: i32, %arg1: i32, %arg2: memref<1x16x1x128xf32, #tpu.memory_space<vmem>>, %arg3: memref<1x1x128xf32, #tpu.memory_space<vmem>>, %arg4: memref<1x1x128xf32, #tpu.memory_space<vmem>>, %arg5: memref<1x1x128xf32, #tpu.memory_space<vmem>>, %arg6: memref<1x128xf32, #tpu.memory_space<vmem>>, %arg7: memref<1x128xf32, #tpu.memory_space<vmem>>) attributes {dimension_semantics = [#tpu.dimension_semantics<parallel>, #tpu.dimension_semantics<arbitrary>], iteration_bounds = array<i64: 2, 1>, scalar_prefetch = 0 : i64, scratch_operands = 2 : i64, tpu.core_type = #tpu.core_type<tc>, window_params = [{transform_indices = @transform_0, window_bounds = array<i64: 1, 16, 1, 128>}, {transform_indices = @transform_1, window_bounds = array<i64: 1, 1, 128>}, {transform_indices = @transform_2, window_bounds = array<i64: 1, 1, 128>}, {transform_indices = @transform_3, window_bounds = array<i64: 1, 1, 128>}]} {
    %c0_i32 = arith.constant 0 : i32
    %0 = arith.cmpi eq, %arg1, %c0_i32 : i32
    %1 = arith.extui %0 : i1 to i32
    %cst = arith.constant 0xFF800000 : f32
    %c0_i32_0 = arith.constant 0 : i32
    %2 = arith.cmpi ne, %1, %c0_i32_0 : i32
    scf.if %2 {
      %477 = vector.broadcast %cst : f32 to vector<1x128xf32>
      %c0_145 = arith.constant 0 : index
      %c0_146 = arith.constant 0 : index
      %478 = vector.load %arg6[%c0_145, %c0_146] : memref<1x128xf32, #tpu.memory_space<vmem>>, vector<1x128xf32>
      tpu.vector_store %arg6[%c0_145, %c0_146], %477 {strides = array<i32>} : memref<1x128xf32, #tpu.memory_space<vmem>>, vector<1x128xf32>,
      %cst_147 = arith.constant -1.000000e+00 : f32
      %479 = vector.broadcast %cst_147 : f32 to vector<1x128xf32>
      %c0_148 = arith.constant 0 : index
      %c0_149 = arith.constant 0 : index
      %480 = vector.load %arg7[%c0_148, %c0_149] : memref<1x128xf32, #tpu.memory_space<vmem>>, vector<1x128xf32>
      tpu.vector_store %arg7[%c0_148, %c0_149], %479 {strides = array<i32>} : memref<1x128xf32, #tpu.memory_space<vmem>>, vector<1x128xf32>,
    } else {
    }
    %c0 = arith.constant 0 : index
    %c0_1 = arith.constant 0 : index
    %c0_2 = arith.constant 0 : index
    %c0_3 = arith.constant 0 : index
    %3 = vector.load %arg2[%c0, %c0_1, %c0_2, %c0_3] : memref<1x16x1x128xf32, #tpu.memory_space<vmem>>, vector<1x1x1x128xf32>
    %4 = vector.shape_cast %3 : vector<1x1x1x128xf32> to vector<1x128xf32>
    %c0_i32_4 = arith.constant 0 : i32
    %5 = vector.broadcast %c0_i32_4 : i32 to vector<1x128xi32>
    %c1_i32 = arith.constant 1 : i32
    %c0_5 = arith.constant 0 : index
    %6 = arith.index_cast %c1_i32 : i32 to index
    %c0_6 = arith.constant 0 : index
    %c0_7 = arith.constant 0 : index
    %7 = vector.load %arg2[%c0_5, %6, %c0_6, %c0_7] : memref<1x16x1x128xf32, #tpu.memory_space<vmem>>, vector<1x1x1x128xf32>
    %8 = vector.shape_cast %7 : vector<1x1x1x128xf32> to vector<1x128xf32>
    %9 = arith.cmpf ogt, %8, %4 : vector<1x128xf32>
    %10 = arith.select %9, %8, %4 : vector<1x128xi1>, vector<1x128xf32>
    %11 = vector.broadcast %c1_i32 : i32 to vector<1x128xi32>
    %12 = arith.select %9, %11, %5 : vector<1x128xi1>, vector<1x128xi32>
    %c2_i32 = arith.constant 2 : i32
    %c0_8 = arith.constant 0 : index
    %13 = arith.index_cast %c2_i32 : i32 to index
    %c0_9 = arith.constant 0 : index
    %c0_10 = arith.constant 0 : index
    %14 = vector.load %arg2[%c0_8, %13, %c0_9, %c0_10] : memref<1x16x1x128xf32, #tpu.memory_space<vmem>>, vector<1x1x1x128xf32>
    %15 = vector.shape_cast %14 : vector<1x1x1x128xf32> to vector<1x128xf32>
    %16 = arith.cmpf ogt, %15, %10 : vector<1x128xf32>
    %17 = arith.select %16, %15, %10 : vector<1x128xi1>, vector<1x128xf32>
    %18 = vector.broadcast %c2_i32 : i32 to vector<1x128xi32>
    %19 = arith.select %16, %18, %12 : vector<1x128xi1>, vector<1x128xi32>
    %c3_i32 = arith.constant 3 : i32
    %c0_11 = arith.constant 0 : index
    %20 = arith.index_cast %c3_i32 : i32 to index
    %c0_12 = arith.constant 0 : index
    %c0_13 = arith.constant 0 : index
    %21 = vector.load %arg2[%c0_11, %20, %c0_12, %c0_13] : memref<1x16x1x128xf32, #tpu.memory_space<vmem>>, vector<1x1x1x128xf32>
    %22 = vector.shape_cast %21 : vector<1x1x1x128xf32> to vector<1x128xf32>
    %23 = arith.cmpf ogt, %22, %17 : vector<1x128xf32>
    %24 = arith.select %23, %22, %17 : vector<1x128xi1>, vector<1x128xf32>
    %25 = vector.broadcast %c3_i32 : i32 to vector<1x128xi32>
    %26 = arith.select %23, %25, %19 : vector<1x128xi1>, vector<1x128xi32>
    %c4_i32 = arith.constant 4 : i32
    %c0_14 = arith.constant 0 : index
    %27 = arith.index_cast %c4_i32 : i32 to index
    %c0_15 = arith.constant 0 : index
    %c0_16 = arith.constant 0 : index
    %28 = vector.load %arg2[%c0_14, %27, %c0_15, %c0_16] : memref<1x16x1x128xf32, #tpu.memory_space<vmem>>, vector<1x1x1x128xf32>
    %29 = vector.shape_cast %28 : vector<1x1x1x128xf32> to vector<1x128xf32>
    %30 = arith.cmpf ogt, %29, %24 : vector<1x128xf32>
    %31 = arith.select %30, %29, %24 : vector<1x128xi1>, vector<1x128xf32>
    %32 = vector.broadcast %c4_i32 : i32 to vector<1x128xi32>
    %33 = arith.select %30, %32, %26 : vector<1x128xi1>, vector<1x128xi32>
    %c5_i32 = arith.constant 5 : i32
    %c0_17 = arith.constant 0 : index
    %34 = arith.index_cast %c5_i32 : i32 to index
    %c0_18 = arith.constant 0 : index
    %c0_19 = arith.constant 0 : index
    %35 = vector.load %arg2[%c0_17, %34, %c0_18, %c0_19] : memref<1x16x1x128xf32, #tpu.memory_space<vmem>>, vector<1x1x1x128xf32>
    %36 = vector.shape_cast %35 : vector<1x1x1x128xf32> to vector<1x128xf32>
    %37 = arith.cmpf ogt, %36, %31 : vector<1x128xf32>
    %38 = arith.select %37, %36, %31 : vector<1x128xi1>, vector<1x128xf32>
    %39 = vector.broadcast %c5_i32 : i32 to vector<1x128xi32>
    %40 = arith.select %37, %39, %33 : vector<1x128xi1>, vector<1x128xi32>
    %c6_i32 = arith.constant 6 : i32
    %c0_20 = arith.constant 0 : index
    %41 = arith.index_cast %c6_i32 : i32 to index
    %c0_21 = arith.constant 0 : index
    %c0_22 = arith.constant 0 : index
    %42 = vector.load %arg2[%c0_20, %41, %c0_21, %c0_22] : memref<1x16x1x128xf32, #tpu.memory_space<vmem>>, vector<1x1x1x128xf32>
    %43 = vector.shape_cast %42 : vector<1x1x1x128xf32> to vector<1x128xf32>
    %44 = arith.cmpf ogt, %43, %38 : vector<1x128xf32>
    %45 = arith.select %44, %43, %38 : vector<1x128xi1>, vector<1x128xf32>
    %46 = vector.broadcast %c6_i32 : i32 to vector<1x128xi32>
    %47 = arith.select %44, %46, %40 : vector<1x128xi1>, vector<1x128xi32>
    %c7_i32 = arith.constant 7 : i32
    %c0_23 = arith.constant 0 : index
    %48 = arith.index_cast %c7_i32 : i32 to index
    %c0_24 = arith.constant 0 : index
    %c0_25 = arith.constant 0 : index
    %49 = vector.load %arg2[%c0_23, %48, %c0_24, %c0_25] : memref<1x16x1x128xf32, #tpu.memory_space<vmem>>, vector<1x1x1x128xf32>
    %50 = vector.shape_cast %49 : vector<1x1x1x128xf32> to vector<1x128xf32>
    %51 = arith.cmpf ogt, %50, %45 : vector<1x128xf32>
    %52 = arith.select %51, %50, %45 : vector<1x128xi1>, vector<1x128xf32>
    %53 = vector.broadcast %c7_i32 : i32 to vector<1x128xi32>
    %54 = arith.select %51, %53, %47 : vector<1x128xi1>, vector<1x128xi32>
    %c8_i32 = arith.constant 8 : i32
    %c0_26 = arith.constant 0 : index
    %55 = arith.index_cast %c8_i32 : i32 to index
    %c0_27 = arith.constant 0 : index
    %c0_28 = arith.constant 0 : index
    %56 = vector.load %arg2[%c0_26, %55, %c0_27, %c0_28] : memref<1x16x1x128xf32, #tpu.memory_space<vmem>>, vector<1x1x1x128xf32>
    %57 = vector.shape_cast %56 : vector<1x1x1x128xf32> to vector<1x128xf32>
    %58 = arith.cmpf ogt, %57, %52 : vector<1x128xf32>
    %59 = arith.select %58, %57, %52 : vector<1x128xi1>, vector<1x128xf32>
    %60 = vector.broadcast %c8_i32 : i32 to vector<1x128xi32>
    %61 = arith.select %58, %60, %54 : vector<1x128xi1>, vector<1x128xi32>
    %c9_i32 = arith.constant 9 : i32
    %c0_29 = arith.constant 0 : index
    %62 = arith.index_cast %c9_i32 : i32 to index
    %c0_30 = arith.constant 0 : index
    %c0_31 = arith.constant 0 : index
    %63 = vector.load %arg2[%c0_29, %62, %c0_30, %c0_31] : memref<1x16x1x128xf32, #tpu.memory_space<vmem>>, vector<1x1x1x128xf32>
    %64 = vector.shape_cast %63 : vector<1x1x1x128xf32> to vector<1x128xf32>
    %65 = arith.cmpf ogt, %64, %59 : vector<1x128xf32>
    %66 = arith.select %65, %64, %59 : vector<1x128xi1>, vector<1x128xf32>
    %67 = vector.broadcast %c9_i32 : i32 to vector<1x128xi32>
    %68 = arith.select %65, %67, %61 : vector<1x128xi1>, vector<1x128xi32>
    %c10_i32 = arith.constant 10 : i32
    %c0_32 = arith.constant 0 : index
    %69 = arith.index_cast %c10_i32 : i32 to index
    %c0_33 = arith.constant 0 : index
    %c0_34 = arith.constant 0 : index
    %70 = vector.load %arg2[%c0_32, %69, %c0_33, %c0_34] : memref<1x16x1x128xf32, #tpu.memory_space<vmem>>, vector<1x1x1x128xf32>
    %71 = vector.shape_cast %70 : vector<1x1x1x128xf32> to vector<1x128xf32>
    %72 = arith.cmpf ogt, %71, %66 : vector<1x128xf32>
    %73 = arith.select %72, %71, %66 : vector<1x128xi1>, vector<1x128xf32>
    %74 = vector.broadcast %c10_i32 : i32 to vector<1x128xi32>
    %75 = arith.select %72, %74, %68 : vector<1x128xi1>, vector<1x128xi32>
    %c11_i32 = arith.constant 11 : i32
    %c0_35 = arith.constant 0 : index
    %76 = arith.index_cast %c11_i32 : i32 to index
    %c0_36 = arith.constant 0 : index
    %c0_37 = arith.constant 0 : index
    %77 = vector.load %arg2[%c0_35, %76, %c0_36, %c0_37] : memref<1x16x1x128xf32, #tpu.memory_space<vmem>>, vector<1x1x1x128xf32>
    %78 = vector.shape_cast %77 : vector<1x1x1x128xf32> to vector<1x128xf32>
    %79 = arith.cmpf ogt, %78, %73 : vector<1x128xf32>
    %80 = arith.select %79, %78, %73 : vector<1x128xi1>, vector<1x128xf32>
    %81 = vector.broadcast %c11_i32 : i32 to vector<1x128xi32>
    %82 = arith.select %79, %81, %75 : vector<1x128xi1>, vector<1x128xi32>
    %c12_i32 = arith.constant 12 : i32
    %c0_38 = arith.constant 0 : index
    %83 = arith.index_cast %c12_i32 : i32 to index
    %c0_39 = arith.constant 0 : index
    %c0_40 = arith.constant 0 : index
    %84 = vector.load %arg2[%c0_38, %83, %c0_39, %c0_40] : memref<1x16x1x128xf32, #tpu.memory_space<vmem>>, vector<1x1x1x128xf32>
    %85 = vector.shape_cast %84 : vector<1x1x1x128xf32> to vector<1x128xf32>
    %86 = arith.cmpf ogt, %85, %80 : vector<1x128xf32>
    %87 = arith.select %86, %85, %80 : vector<1x128xi1>, vector<1x128xf32>
    %88 = vector.broadcast %c12_i32 : i32 to vector<1x128xi32>
    %89 = arith.select %86, %88, %82 : vector<1x128xi1>, vector<1x128xi32>
    %c13_i32 = arith.constant 13 : i32
    %c0_41 = arith.constant 0 : index
    %90 = arith.index_cast %c13_i32 : i32 to index
    %c0_42 = arith.constant 0 : index
    %c0_43 = arith.constant 0 : index
    %91 = vector.load %arg2[%c0_41, %90, %c0_42, %c0_43] : memref<1x16x1x128xf32, #tpu.memory_space<vmem>>, vector<1x1x1x128xf32>
    %92 = vector.shape_cast %91 : vector<1x1x1x128xf32> to vector<1x128xf32>
    %93 = arith.cmpf ogt, %92, %87 : vector<1x128xf32>
    %94 = arith.select %93, %92, %87 : vector<1x128xi1>, vector<1x128xf32>
    %95 = vector.broadcast %c13_i32 : i32 to vector<1x128xi32>
    %96 = arith.select %93, %95, %89 : vector<1x128xi1>, vector<1x128xi32>
    %c14_i32 = arith.constant 14 : i32
    %c0_44 = arith.constant 0 : index
    %97 = arith.index_cast %c14_i32 : i32 to index
    %c0_45 = arith.constant 0 : index
    %c0_46 = arith.constant 0 : index
    %98 = vector.load %arg2[%c0_44, %97, %c0_45, %c0_46] : memref<1x16x1x128xf32, #tpu.memory_space<vmem>>, vector<1x1x1x128xf32>
    %99 = vector.shape_cast %98 : vector<1x1x1x128xf32> to vector<1x128xf32>
    %100 = arith.cmpf ogt, %99, %94 : vector<1x128xf32>
    %101 = arith.select %100, %99, %94 : vector<1x128xi1>, vector<1x128xf32>
    %102 = vector.broadcast %c14_i32 : i32 to vector<1x128xi32>
    %103 = arith.select %100, %102, %96 : vector<1x128xi1>, vector<1x128xi32>
    %c15_i32 = arith.constant 15 : i32
    %c0_47 = arith.constant 0 : index
    %104 = arith.index_cast %c15_i32 : i32 to index
    %c0_48 = arith.constant 0 : index
    %c0_49 = arith.constant 0 : index
    %105 = vector.load %arg2[%c0_47, %104, %c0_48, %c0_49] : memref<1x16x1x128xf32, #tpu.memory_space<vmem>>, vector<1x1x1x128xf32>
    %106 = vector.shape_cast %105 : vector<1x1x1x128xf32> to vector<1x128xf32>
    %107 = arith.cmpf ogt, %106, %101 : vector<1x128xf32>
    %108 = arith.select %107, %106, %101 : vector<1x128xi1>, vector<1x128xf32>
    %109 = vector.broadcast %c15_i32 : i32 to vector<1x128xi32>
    %110 = arith.select %107, %109, %103 : vector<1x128xi1>, vector<1x128xi32>
    %c15_i32_50 = arith.constant 15 : i32
    %111 = arith.sitofp %110 : vector<1x128xi32> to vector<1x128xf32>
    %c0_51 = arith.constant 0 : index
    %c0_52 = arith.constant 0 : index
    %c0_53 = arith.constant 0 : index
    %112 = vector.load %arg5[%c0_51, %c0_52, %c0_53] : memref<1x1x128xf32, #tpu.memory_space<vmem>>, vector<1x1x128xf32>
    %113 = vector.shape_cast %112 : vector<1x1x128xf32> to vector<1x128xf32>
    %114 = vector.shape_cast %111 : vector<1x128xf32> to vector<1x1x128xf32>
    tpu.vector_store %arg5[%c0_51, %c0_52, %c0_53], %114 {strides = array<i32>} : memref<1x1x128xf32, #tpu.memory_space<vmem>>, vector<1x1x128xf32>,
    %115 = tpu.iota {dimensions = array<i32: 0>} : vector<1x128xi32>
    %116 = tpu.iota {dimensions = array<i32: 1>} : vector<1x128xi32>
    %c128_i32 = arith.constant 128 : i32
    %117 = arith.muli %arg1, %c128_i32 : i32
    %c128_i32_54 = arith.constant 128 : i32
    %118 = vector.broadcast %c128_i32_54 : i32 to vector<1x128xi32>
    %119 = arith.muli %115, %118 : vector<1x128xi32>
    %120 = vector.broadcast %117 : i32 to vector<1x128xi32>
    %121 = arith.addi %120, %119 : vector<1x128xi32>
    %122 = arith.addi %121, %116 : vector<1x128xi32>
    %c128_i32_55 = arith.constant 128 : i32
    %123 = vector.broadcast %c128_i32_55 : i32 to vector<1x128xi32>
    %124 = arith.cmpi slt, %122, %123 : vector<1x128xi32>
    %125 = arith.cmpf one, %108, %108 : vector<1x128xf32>
    %cst_56 = arith.constant dense<true> : vector<1x128xi1>
    %126 = arith.xori %125, %cst_56 : vector<1x128xi1>
    %127 = arith.andi %124, %126 : vector<1x128xi1>
    %cst_57 = arith.constant 0xFF800000 : f32
    %128 = vector.broadcast %cst_57 : f32 to vector<1x128xf32>
    %129 = arith.select %127, %108, %128 : vector<1x128xi1>, vector<1x128xf32>
    %130 = arith.sitofp %122 : vector<1x128xi32> to vector<1x128xf32>
    %131 = tpu.iota {dimensions = array<i32: 1>} : vector<1x128xi32>
    %c0_58 = arith.constant 0 : index
    %c0_59 = arith.constant 0 : index
    %132 = vector.load %arg6[%c0_58, %c0_59] : memref<1x128xf32, #tpu.memory_space<vmem>>, vector<1x128xf32>
    %c0_60 = arith.constant 0 : index
    %c0_61 = arith.constant 0 : index
    %133 = vector.load %arg7[%c0_60, %c0_61] : memref<1x128xf32, #tpu.memory_space<vmem>>, vector<1x128xf32>
    %cst_62 = arith.constant 0xFF800000 : f32
    %134 = vector.broadcast %cst_62 : f32 to vector<1x128xf32>
    %cst_63 = arith.constant -1.000000e+00 : f32
    %135 = vector.broadcast %cst_63 : f32 to vector<1x128xf32>
    %cst_64 = arith.constant 0x7F800000 : f32
    %cst_65 = arith.constant 0xFF800000 : f32
    %c0_i32_66 = arith.constant 0 : i32
    %cst_67 = arith.constant dense<0xFF800000> : vector<1xf32>
    %136 = vector.multi_reduction <maximumf>, %129, %cst_67 [1] : vector<1x128xf32> to vector<1xf32>
    %137 = vector.shape_cast %136 : vector<1xf32> to vector<1x1xf32>
    %cst_68 = arith.constant dense<0xFF800000> : vector<1xf32>
    %138 = vector.multi_reduction <maximumf>, %137, %cst_68 [0] : vector<1x1xf32> to vector<1xf32>
    %139 = vector.shape_cast %138 : vector<1xf32> to vector<1x1xf32>
    %cst_69 = arith.constant dense<0xFF800000> : vector<1xf32>
    %140 = vector.multi_reduction <maximumf>, %132, %cst_69 [1] : vector<1x128xf32> to vector<1xf32>
    %141 = vector.shape_cast %140 : vector<1xf32> to vector<1x1xf32>
    %cst_70 = arith.constant dense<0xFF800000> : vector<1xf32>
    %142 = vector.multi_reduction <maximumf>, %141, %cst_70 [0] : vector<1x1xf32> to vector<1xf32>
    %143 = vector.shape_cast %142 : vector<1xf32> to vector<1x1xf32>
    %144 = arith.maximumf %139, %143 : vector<1x1xf32>
    %145 = vector.broadcast %144 : vector<1x1xf32> to vector<1x128xf32>
    %146 = arith.cmpf oeq, %132, %145 : vector<1x128xf32>
    %147 = vector.broadcast %cst_64 : f32 to vector<1x128xf32>
    %148 = arith.select %146, %133, %147 : vector<1x128xi1>, vector<1x128xf32>
    %cst_71 = arith.constant dense<0x7F800000> : vector<1xf32>
    %149 = vector.multi_reduction <minimumf>, %148, %cst_71 [1] : vector<1x128xf32> to vector<1xf32>
    %150 = vector.shape_cast %149 : vector<1xf32> to vector<1x1xf32>
    %cst_72 = arith.constant dense<0x7F800000> : vector<1xf32>
    %151 = vector.multi_reduction <minimumf>, %150, %cst_72 [0] : vector<1x1xf32> to vector<1xf32>
    %152 = vector.shape_cast %151 : vector<1xf32> to vector<1x1xf32>
    %153 = vector.broadcast %144 : vector<1x1xf32> to vector<1x128xf32>
    %154 = arith.cmpf oeq, %129, %153 : vector<1x128xf32>
    %155 = vector.broadcast %cst_64 : f32 to vector<1x128xf32>
    %156 = arith.select %154, %130, %155 : vector<1x128xi1>, vector<1x128xf32>
    %cst_73 = arith.constant dense<0x7F800000> : vector<1xf32>
    %157 = vector.multi_reduction <minimumf>, %156, %cst_73 [1] : vector<1x128xf32> to vector<1xf32>
    %158 = vector.shape_cast %157 : vector<1xf32> to vector<1x1xf32>
    %cst_74 = arith.constant dense<0x7F800000> : vector<1xf32>
    %159 = vector.multi_reduction <minimumf>, %158, %cst_74 [0] : vector<1x1xf32> to vector<1xf32>
    %160 = vector.shape_cast %159 : vector<1xf32> to vector<1x1xf32>
    %161 = arith.minimumf %152, %160 : vector<1x1xf32>
    %162 = vector.broadcast %c0_i32_66 : i32 to vector<1x128xi32>
    %163 = arith.cmpi eq, %131, %162 : vector<1x128xi32>
    %164 = vector.shape_cast %144 : vector<1x1xf32> to vector<1x1xf32>
    %165 = vector.broadcast %164 : vector<1x1xf32> to vector<1x128xf32>
    %166 = arith.select %163, %165, %134 : vector<1x128xi1>, vector<1x128xf32>
    %167 = vector.shape_cast %161 : vector<1x1xf32> to vector<1x1xf32>
    %168 = vector.broadcast %167 : vector<1x1xf32> to vector<1x128xf32>
    %169 = arith.select %163, %168, %135 : vector<1x128xi1>, vector<1x128xf32>
    %170 = vector.broadcast %161 : vector<1x1xf32> to vector<1x128xf32>
    %171 = arith.cmpf oeq, %130, %170 : vector<1x128xf32>
    %172 = vector.broadcast %cst_65 : f32 to vector<1x128xf32>
    %173 = arith.select %171, %172, %129 : vector<1x128xi1>, vector<1x128xf32>
    %174 = vector.broadcast %161 : vector<1x1xf32> to vector<1x128xf32>
    %175 = arith.cmpf oeq, %133, %174 : vector<1x128xf32>
    %176 = vector.broadcast %cst_65 : f32 to vector<1x128xf32>
    %177 = arith.select %175, %176, %132 : vector<1x128xi1>, vector<1x128xf32>
    %c1_i32_75 = arith.constant 1 : i32
    %cst_76 = arith.constant dense<0xFF800000> : vector<1xf32>
    %178 = vector.multi_reduction <maximumf>, %173, %cst_76 [1] : vector<1x128xf32> to vector<1xf32>
    %179 = vector.shape_cast %178 : vector<1xf32> to vector<1x1xf32>
    %cst_77 = arith.constant dense<0xFF800000> : vector<1xf32>
    %180 = vector.multi_reduction <maximumf>, %179, %cst_77 [0] : vector<1x1xf32> to vector<1xf32>
    %181 = vector.shape_cast %180 : vector<1xf32> to vector<1x1xf32>
    %cst_78 = arith.constant dense<0xFF800000> : vector<1xf32>
    %182 = vector.multi_reduction <maximumf>, %177, %cst_78 [1] : vector<1x128xf32> to vector<1xf32>
    %183 = vector.shape_cast %182 : vector<1xf32> to vector<1x1xf32>
    %cst_79 = arith.constant dense<0xFF800000> : vector<1xf32>
    %184 = vector.multi_reduction <maximumf>, %183, %cst_79 [0] : vector<1x1xf32> to vector<1xf32>
    %185 = vector.shape_cast %184 : vector<1xf32> to vector<1x1xf32>
    %186 = arith.maximumf %181, %185 : vector<1x1xf32>
    %187 = vector.broadcast %186 : vector<1x1xf32> to vector<1x128xf32>
    %188 = arith.cmpf oeq, %177, %187 : vector<1x128xf32>
    %189 = vector.broadcast %cst_64 : f32 to vector<1x128xf32>
    %190 = arith.select %188, %133, %189 : vector<1x128xi1>, vector<1x128xf32>
    %cst_80 = arith.constant dense<0x7F800000> : vector<1xf32>
    %191 = vector.multi_reduction <minimumf>, %190, %cst_80 [1] : vector<1x128xf32> to vector<1xf32>
    %192 = vector.shape_cast %191 : vector<1xf32> to vector<1x1xf32>
    %cst_81 = arith.constant dense<0x7F800000> : vector<1xf32>
    %193 = vector.multi_reduction <minimumf>, %192, %cst_81 [0] : vector<1x1xf32> to vector<1xf32>
    %194 = vector.shape_cast %193 : vector<1xf32> to vector<1x1xf32>
    %195 = vector.broadcast %186 : vector<1x1xf32> to vector<1x128xf32>
    %196 = arith.cmpf oeq, %173, %195 : vector<1x128xf32>
    %197 = vector.broadcast %cst_64 : f32 to vector<1x128xf32>
    %198 = arith.select %196, %130, %197 : vector<1x128xi1>, vector<1x128xf32>
    %cst_82 = arith.constant dense<0x7F800000> : vector<1xf32>
    %199 = vector.multi_reduction <minimumf>, %198, %cst_82 [1] : vector<1x128xf32> to vector<1xf32>
    %200 = vector.shape_cast %199 : vector<1xf32> to vector<1x1xf32>
    %cst_83 = arith.constant dense<0x7F800000> : vector<1xf32>
    %201 = vector.multi_reduction <minimumf>, %200, %cst_83 [0] : vector<1x1xf32> to vector<1xf32>
    %202 = vector.shape_cast %201 : vector<1xf32> to vector<1x1xf32>
    %203 = arith.minimumf %194, %202 : vector<1x1xf32>
    %204 = vector.broadcast %c1_i32_75 : i32 to vector<1x128xi32>
    %205 = arith.cmpi eq, %131, %204 : vector<1x128xi32>
    %206 = vector.shape_cast %186 : vector<1x1xf32> to vector<1x1xf32>
    %207 = vector.broadcast %206 : vector<1x1xf32> to vector<1x128xf32>
    %208 = arith.select %205, %207, %166 : vector<1x128xi1>, vector<1x128xf32>
    %209 = vector.shape_cast %203 : vector<1x1xf32> to vector<1x1xf32>
    %210 = vector.broadcast %209 : vector<1x1xf32> to vector<1x128xf32>
    %211 = arith.select %205, %210, %169 : vector<1x128xi1>, vector<1x128xf32>
    %212 = vector.broadcast %203 : vector<1x1xf32> to vector<1x128xf32>
    %213 = arith.cmpf oeq, %130, %212 : vector<1x128xf32>
    %214 = vector.broadcast %cst_65 : f32 to vector<1x128xf32>
    %215 = arith.select %213, %214, %173 : vector<1x128xi1>, vector<1x128xf32>
    %216 = vector.broadcast %203 : vector<1x1xf32> to vector<1x128xf32>
    %217 = arith.cmpf oeq, %133, %216 : vector<1x128xf32>
    %218 = vector.broadcast %cst_65 : f32 to vector<1x128xf32>
    %219 = arith.select %217, %218, %177 : vector<1x128xi1>, vector<1x128xf32>
    %c2_i32_84 = arith.constant 2 : i32
    %cst_85 = arith.constant dense<0xFF800000> : vector<1xf32>
    %220 = vector.multi_reduction <maximumf>, %215, %cst_85 [1] : vector<1x128xf32> to vector<1xf32>
    %221 = vector.shape_cast %220 : vector<1xf32> to vector<1x1xf32>
    %cst_86 = arith.constant dense<0xFF800000> : vector<1xf32>
    %222 = vector.multi_reduction <maximumf>, %221, %cst_86 [0] : vector<1x1xf32> to vector<1xf32>
    %223 = vector.shape_cast %222 : vector<1xf32> to vector<1x1xf32>
    %cst_87 = arith.constant dense<0xFF800000> : vector<1xf32>
    %224 = vector.multi_reduction <maximumf>, %219, %cst_87 [1] : vector<1x128xf32> to vector<1xf32>
    %225 = vector.shape_cast %224 : vector<1xf32> to vector<1x1xf32>
    %cst_88 = arith.constant dense<0xFF800000> : vector<1xf32>
    %226 = vector.multi_reduction <maximumf>, %225, %cst_88 [0] : vector<1x1xf32> to vector<1xf32>
    %227 = vector.shape_cast %226 : vector<1xf32> to vector<1x1xf32>
    %228 = arith.maximumf %223, %227 : vector<1x1xf32>
    %229 = vector.broadcast %228 : vector<1x1xf32> to vector<1x128xf32>
    %230 = arith.cmpf oeq, %219, %229 : vector<1x128xf32>
    %231 = vector.broadcast %cst_64 : f32 to vector<1x128xf32>
    %232 = arith.select %230, %133, %231 : vector<1x128xi1>, vector<1x128xf32>
    %cst_89 = arith.constant dense<0x7F800000> : vector<1xf32>
    %233 = vector.multi_reduction <minimumf>, %232, %cst_89 [1] : vector<1x128xf32> to vector<1xf32>
    %234 = vector.shape_cast %233 : vector<1xf32> to vector<1x1xf32>
    %cst_90 = arith.constant dense<0x7F800000> : vector<1xf32>
    %235 = vector.multi_reduction <minimumf>, %234, %cst_90 [0] : vector<1x1xf32> to vector<1xf32>
    %236 = vector.shape_cast %235 : vector<1xf32> to vector<1x1xf32>
    %237 = vector.broadcast %228 : vector<1x1xf32> to vector<1x128xf32>
    %238 = arith.cmpf oeq, %215, %237 : vector<1x128xf32>
    %239 = vector.broadcast %cst_64 : f32 to vector<1x128xf32>
    %240 = arith.select %238, %130, %239 : vector<1x128xi1>, vector<1x128xf32>
    %cst_91 = arith.constant dense<0x7F800000> : vector<1xf32>
    %241 = vector.multi_reduction <minimumf>, %240, %cst_91 [1] : vector<1x128xf32> to vector<1xf32>
    %242 = vector.shape_cast %241 : vector<1xf32> to vector<1x1xf32>
    %cst_92 = arith.constant dense<0x7F800000> : vector<1xf32>
    %243 = vector.multi_reduction <minimumf>, %242, %cst_92 [0] : vector<1x1xf32> to vector<1xf32>
    %244 = vector.shape_cast %243 : vector<1xf32> to vector<1x1xf32>
    %245 = arith.minimumf %236, %244 : vector<1x1xf32>
    %246 = vector.broadcast %c2_i32_84 : i32 to vector<1x128xi32>
    %247 = arith.cmpi eq, %131, %246 : vector<1x128xi32>
    %248 = vector.shape_cast %228 : vector<1x1xf32> to vector<1x1xf32>
    %249 = vector.broadcast %248 : vector<1x1xf32> to vector<1x128xf32>
    %250 = arith.select %247, %249, %208 : vector<1x128xi1>, vector<1x128xf32>
    %251 = vector.shape_cast %245 : vector<1x1xf32> to vector<1x1xf32>
    %252 = vector.broadcast %251 : vector<1x1xf32> to vector<1x128xf32>
    %253 = arith.select %247, %252, %211 : vector<1x128xi1>, vector<1x128xf32>
    %254 = vector.broadcast %245 : vector<1x1xf32> to vector<1x128xf32>
    %255 = arith.cmpf oeq, %130, %254 : vector<1x128xf32>
    %256 = vector.broadcast %cst_65 : f32 to vector<1x128xf32>
    %257 = arith.select %255, %256, %215 : vector<1x128xi1>, vector<1x128xf32>
    %258 = vector.broadcast %245 : vector<1x1xf32> to vector<1x128xf32>
    %259 = arith.cmpf oeq, %133, %258 : vector<1x128xf32>
    %260 = vector.broadcast %cst_65 : f32 to vector<1x128xf32>
    %261 = arith.select %259, %260, %219 : vector<1x128xi1>, vector<1x128xf32>
    %c3_i32_93 = arith.constant 3 : i32
    %cst_94 = arith.constant dense<0xFF800000> : vector<1xf32>
    %262 = vector.multi_reduction <maximumf>, %257, %cst_94 [1] : vector<1x128xf32> to vector<1xf32>
    %263 = vector.shape_cast %262 : vector<1xf32> to vector<1x1xf32>
    %cst_95 = arith.constant dense<0xFF800000> : vector<1xf32>
    %264 = vector.multi_reduction <maximumf>, %263, %cst_95 [0] : vector<1x1xf32> to vector<1xf32>
    %265 = vector.shape_cast %264 : vector<1xf32> to vector<1x1xf32>
    %cst_96 = arith.constant dense<0xFF800000> : vector<1xf32>
    %266 = vector.multi_reduction <maximumf>, %261, %cst_96 [1] : vector<1x128xf32> to vector<1xf32>
    %267 = vector.shape_cast %266 : vector<1xf32> to vector<1x1xf32>
    %cst_97 = arith.constant dense<0xFF800000> : vector<1xf32>
    %268 = vector.multi_reduction <maximumf>, %267, %cst_97 [0] : vector<1x1xf32> to vector<1xf32>
    %269 = vector.shape_cast %268 : vector<1xf32> to vector<1x1xf32>
    %270 = arith.maximumf %265, %269 : vector<1x1xf32>
    %271 = vector.broadcast %270 : vector<1x1xf32> to vector<1x128xf32>
    %272 = arith.cmpf oeq, %261, %271 : vector<1x128xf32>
    %273 = vector.broadcast %cst_64 : f32 to vector<1x128xf32>
    %274 = arith.select %272, %133, %273 : vector<1x128xi1>, vector<1x128xf32>
    %cst_98 = arith.constant dense<0x7F800000> : vector<1xf32>
    %275 = vector.multi_reduction <minimumf>, %274, %cst_98 [1] : vector<1x128xf32> to vector<1xf32>
    %276 = vector.shape_cast %275 : vector<1xf32> to vector<1x1xf32>
    %cst_99 = arith.constant dense<0x7F800000> : vector<1xf32>
    %277 = vector.multi_reduction <minimumf>, %276, %cst_99 [0] : vector<1x1xf32> to vector<1xf32>
    %278 = vector.shape_cast %277 : vector<1xf32> to vector<1x1xf32>
    %279 = vector.broadcast %270 : vector<1x1xf32> to vector<1x128xf32>
    %280 = arith.cmpf oeq, %257, %279 : vector<1x128xf32>
    %281 = vector.broadcast %cst_64 : f32 to vector<1x128xf32>
    %282 = arith.select %280, %130, %281 : vector<1x128xi1>, vector<1x128xf32>
    %cst_100 = arith.constant dense<0x7F800000> : vector<1xf32>
    %283 = vector.multi_reduction <minimumf>, %282, %cst_100 [1] : vector<1x128xf32> to vector<1xf32>
    %284 = vector.shape_cast %283 : vector<1xf32> to vector<1x1xf32>
    %cst_101 = arith.constant dense<0x7F800000> : vector<1xf32>
    %285 = vector.multi_reduction <minimumf>, %284, %cst_101 [0] : vector<1x1xf32> to vector<1xf32>
    %286 = vector.shape_cast %285 : vector<1xf32> to vector<1x1xf32>
    %287 = arith.minimumf %278, %286 : vector<1x1xf32>
    %288 = vector.broadcast %c3_i32_93 : i32 to vector<1x128xi32>
    %289 = arith.cmpi eq, %131, %288 : vector<1x128xi32>
    %290 = vector.shape_cast %270 : vector<1x1xf32> to vector<1x1xf32>
    %291 = vector.broadcast %290 : vector<1x1xf32> to vector<1x128xf32>
    %292 = arith.select %289, %291, %250 : vector<1x128xi1>, vector<1x128xf32>
    %293 = vector.shape_cast %287 : vector<1x1xf32> to vector<1x1xf32>
    %294 = vector.broadcast %293 : vector<1x1xf32> to vector<1x128xf32>
    %295 = arith.select %289, %294, %253 : vector<1x128xi1>, vector<1x128xf32>
    %296 = vector.broadcast %287 : vector<1x1xf32> to vector<1x128xf32>
    %297 = arith.cmpf oeq, %130, %296 : vector<1x128xf32>
    %298 = vector.broadcast %cst_65 : f32 to vector<1x128xf32>
    %299 = arith.select %297, %298, %257 : vector<1x128xi1>, vector<1x128xf32>
    %300 = vector.broadcast %287 : vector<1x1xf32> to vector<1x128xf32>
    %301 = arith.cmpf oeq, %133, %300 : vector<1x128xf32>
    %302 = vector.broadcast %cst_65 : f32 to vector<1x128xf32>
    %303 = arith.select %301, %302, %261 : vector<1x128xi1>, vector<1x128xf32>
    %c4_i32_102 = arith.constant 4 : i32
    %cst_103 = arith.constant dense<0xFF800000> : vector<1xf32>
    %304 = vector.multi_reduction <maximumf>, %299, %cst_103 [1] : vector<1x128xf32> to vector<1xf32>
    %305 = vector.shape_cast %304 : vector<1xf32> to vector<1x1xf32>
    %cst_104 = arith.constant dense<0xFF800000> : vector<1xf32>
    %306 = vector.multi_reduction <maximumf>, %305, %cst_104 [0] : vector<1x1xf32> to vector<1xf32>
    %307 = vector.shape_cast %306 : vector<1xf32> to vector<1x1xf32>
    %cst_105 = arith.constant dense<0xFF800000> : vector<1xf32>
    %308 = vector.multi_reduction <maximumf>, %303, %cst_105 [1] : vector<1x128xf32> to vector<1xf32>
    %309 = vector.shape_cast %308 : vector<1xf32> to vector<1x1xf32>
    %cst_106 = arith.constant dense<0xFF800000> : vector<1xf32>
    %310 = vector.multi_reduction <maximumf>, %309, %cst_106 [0] : vector<1x1xf32> to vector<1xf32>
    %311 = vector.shape_cast %310 : vector<1xf32> to vector<1x1xf32>
    %312 = arith.maximumf %307, %311 : vector<1x1xf32>
    %313 = vector.broadcast %312 : vector<1x1xf32> to vector<1x128xf32>
    %314 = arith.cmpf oeq, %303, %313 : vector<1x128xf32>
    %315 = vector.broadcast %cst_64 : f32 to vector<1x128xf32>
    %316 = arith.select %314, %133, %315 : vector<1x128xi1>, vector<1x128xf32>
    %cst_107 = arith.constant dense<0x7F800000> : vector<1xf32>
    %317 = vector.multi_reduction <minimumf>, %316, %cst_107 [1] : vector<1x128xf32> to vector<1xf32>
    %318 = vector.shape_cast %317 : vector<1xf32> to vector<1x1xf32>
    %cst_108 = arith.constant dense<0x7F800000> : vector<1xf32>
    %319 = vector.multi_reduction <minimumf>, %318, %cst_108 [0] : vector<1x1xf32> to vector<1xf32>
    %320 = vector.shape_cast %319 : vector<1xf32> to vector<1x1xf32>
    %321 = vector.broadcast %312 : vector<1x1xf32> to vector<1x128xf32>
    %322 = arith.cmpf oeq, %299, %321 : vector<1x128xf32>
    %323 = vector.broadcast %cst_64 : f32 to vector<1x128xf32>
    %324 = arith.select %322, %130, %323 : vector<1x128xi1>, vector<1x128xf32>
    %cst_109 = arith.constant dense<0x7F800000> : vector<1xf32>
    %325 = vector.multi_reduction <minimumf>, %324, %cst_109 [1] : vector<1x128xf32> to vector<1xf32>
    %326 = vector.shape_cast %325 : vector<1xf32> to vector<1x1xf32>
    %cst_110 = arith.constant dense<0x7F800000> : vector<1xf32>
    %327 = vector.multi_reduction <minimumf>, %326, %cst_110 [0] : vector<1x1xf32> to vector<1xf32>
    %328 = vector.shape_cast %327 : vector<1xf32> to vector<1x1xf32>
    %329 = arith.minimumf %320, %328 : vector<1x1xf32>
    %330 = vector.broadcast %c4_i32_102 : i32 to vector<1x128xi32>
    %331 = arith.cmpi eq, %131, %330 : vector<1x128xi32>
    %332 = vector.shape_cast %312 : vector<1x1xf32> to vector<1x1xf32>
    %333 = vector.broadcast %332 : vector<1x1xf32> to vector<1x128xf32>
    %334 = arith.select %331, %333, %292 : vector<1x128xi1>, vector<1x128xf32>
    %335 = vector.shape_cast %329 : vector<1x1xf32> to vector<1x1xf32>
    %336 = vector.broadcast %335 : vector<1x1xf32> to vector<1x128xf32>
    %337 = arith.select %331, %336, %295 : vector<1x128xi1>, vector<1x128xf32>
    %338 = vector.broadcast %329 : vector<1x1xf32> to vector<1x128xf32>
    %339 = arith.cmpf oeq, %130, %338 : vector<1x128xf32>
    %340 = vector.broadcast %cst_65 : f32 to vector<1x128xf32>
    %341 = arith.select %339, %340, %299 : vector<1x128xi1>, vector<1x128xf32>
    %342 = vector.broadcast %329 : vector<1x1xf32> to vector<1x128xf32>
    %343 = arith.cmpf oeq, %133, %342 : vector<1x128xf32>
    %344 = vector.broadcast %cst_65 : f32 to vector<1x128xf32>
    %345 = arith.select %343, %344, %303 : vector<1x128xi1>, vector<1x128xf32>
    %c5_i32_111 = arith.constant 5 : i32
    %cst_112 = arith.constant dense<0xFF800000> : vector<1xf32>
    %346 = vector.multi_reduction <maximumf>, %341, %cst_112 [1] : vector<1x128xf32> to vector<1xf32>
    %347 = vector.shape_cast %346 : vector<1xf32> to vector<1x1xf32>
    %cst_113 = arith.constant dense<0xFF800000> : vector<1xf32>
    %348 = vector.multi_reduction <maximumf>, %347, %cst_113 [0] : vector<1x1xf32> to vector<1xf32>
    %349 = vector.shape_cast %348 : vector<1xf32> to vector<1x1xf32>
    %cst_114 = arith.constant dense<0xFF800000> : vector<1xf32>
    %350 = vector.multi_reduction <maximumf>, %345, %cst_114 [1] : vector<1x128xf32> to vector<1xf32>
    %351 = vector.shape_cast %350 : vector<1xf32> to vector<1x1xf32>
    %cst_115 = arith.constant dense<0xFF800000> : vector<1xf32>
    %352 = vector.multi_reduction <maximumf>, %351, %cst_115 [0] : vector<1x1xf32> to vector<1xf32>
    %353 = vector.shape_cast %352 : vector<1xf32> to vector<1x1xf32>
    %354 = arith.maximumf %349, %353 : vector<1x1xf32>
    %355 = vector.broadcast %354 : vector<1x1xf32> to vector<1x128xf32>
    %356 = arith.cmpf oeq, %345, %355 : vector<1x128xf32>
    %357 = vector.broadcast %cst_64 : f32 to vector<1x128xf32>
    %358 = arith.select %356, %133, %357 : vector<1x128xi1>, vector<1x128xf32>
    %cst_116 = arith.constant dense<0x7F800000> : vector<1xf32>
    %359 = vector.multi_reduction <minimumf>, %358, %cst_116 [1] : vector<1x128xf32> to vector<1xf32>
    %360 = vector.shape_cast %359 : vector<1xf32> to vector<1x1xf32>
    %cst_117 = arith.constant dense<0x7F800000> : vector<1xf32>
    %361 = vector.multi_reduction <minimumf>, %360, %cst_117 [0] : vector<1x1xf32> to vector<1xf32>
    %362 = vector.shape_cast %361 : vector<1xf32> to vector<1x1xf32>
    %363 = vector.broadcast %354 : vector<1x1xf32> to vector<1x128xf32>
    %364 = arith.cmpf oeq, %341, %363 : vector<1x128xf32>
    %365 = vector.broadcast %cst_64 : f32 to vector<1x128xf32>
    %366 = arith.select %364, %130, %365 : vector<1x128xi1>, vector<1x128xf32>
    %cst_118 = arith.constant dense<0x7F800000> : vector<1xf32>
    %367 = vector.multi_reduction <minimumf>, %366, %cst_118 [1] : vector<1x128xf32> to vector<1xf32>
    %368 = vector.shape_cast %367 : vector<1xf32> to vector<1x1xf32>
    %cst_119 = arith.constant dense<0x7F800000> : vector<1xf32>
    %369 = vector.multi_reduction <minimumf>, %368, %cst_119 [0] : vector<1x1xf32> to vector<1xf32>
    %370 = vector.shape_cast %369 : vector<1xf32> to vector<1x1xf32>
    %371 = arith.minimumf %362, %370 : vector<1x1xf32>
    %372 = vector.broadcast %c5_i32_111 : i32 to vector<1x128xi32>
    %373 = arith.cmpi eq, %131, %372 : vector<1x128xi32>
    %374 = vector.shape_cast %354 : vector<1x1xf32> to vector<1x1xf32>
    %375 = vector.broadcast %374 : vector<1x1xf32> to vector<1x128xf32>
    %376 = arith.select %373, %375, %334 : vector<1x128xi1>, vector<1x128xf32>
    %377 = vector.shape_cast %371 : vector<1x1xf32> to vector<1x1xf32>
    %378 = vector.broadcast %377 : vector<1x1xf32> to vector<1x128xf32>
    %379 = arith.select %373, %378, %337 : vector<1x128xi1>, vector<1x128xf32>
    %380 = vector.broadcast %371 : vector<1x1xf32> to vector<1x128xf32>
    %381 = arith.cmpf oeq, %130, %380 : vector<1x128xf32>
    %382 = vector.broadcast %cst_65 : f32 to vector<1x128xf32>
    %383 = arith.select %381, %382, %341 : vector<1x128xi1>, vector<1x128xf32>
    %384 = vector.broadcast %371 : vector<1x1xf32> to vector<1x128xf32>
    %385 = arith.cmpf oeq, %133, %384 : vector<1x128xf32>
    %386 = vector.broadcast %cst_65 : f32 to vector<1x128xf32>
    %387 = arith.select %385, %386, %345 : vector<1x128xi1>, vector<1x128xf32>
    %c6_i32_120 = arith.constant 6 : i32
    %cst_121 = arith.constant dense<0xFF800000> : vector<1xf32>
    %388 = vector.multi_reduction <maximumf>, %383, %cst_121 [1] : vector<1x128xf32> to vector<1xf32>
    %389 = vector.shape_cast %388 : vector<1xf32> to vector<1x1xf32>
    %cst_122 = arith.constant dense<0xFF800000> : vector<1xf32>
    %390 = vector.multi_reduction <maximumf>, %389, %cst_122 [0] : vector<1x1xf32> to vector<1xf32>
    %391 = vector.shape_cast %390 : vector<1xf32> to vector<1x1xf32>
    %cst_123 = arith.constant dense<0xFF800000> : vector<1xf32>
    %392 = vector.multi_reduction <maximumf>, %387, %cst_123 [1] : vector<1x128xf32> to vector<1xf32>
    %393 = vector.shape_cast %392 : vector<1xf32> to vector<1x1xf32>
    %cst_124 = arith.constant dense<0xFF800000> : vector<1xf32>
    %394 = vector.multi_reduction <maximumf>, %393, %cst_124 [0] : vector<1x1xf32> to vector<1xf32>
    %395 = vector.shape_cast %394 : vector<1xf32> to vector<1x1xf32>
    %396 = arith.maximumf %391, %395 : vector<1x1xf32>
    %397 = vector.broadcast %396 : vector<1x1xf32> to vector<1x128xf32>
    %398 = arith.cmpf oeq, %387, %397 : vector<1x128xf32>
    %399 = vector.broadcast %cst_64 : f32 to vector<1x128xf32>
    %400 = arith.select %398, %133, %399 : vector<1x128xi1>, vector<1x128xf32>
    %cst_125 = arith.constant dense<0x7F800000> : vector<1xf32>
    %401 = vector.multi_reduction <minimumf>, %400, %cst_125 [1] : vector<1x128xf32> to vector<1xf32>
    %402 = vector.shape_cast %401 : vector<1xf32> to vector<1x1xf32>
    %cst_126 = arith.constant dense<0x7F800000> : vector<1xf32>
    %403 = vector.multi_reduction <minimumf>, %402, %cst_126 [0] : vector<1x1xf32> to vector<1xf32>
    %404 = vector.shape_cast %403 : vector<1xf32> to vector<1x1xf32>
    %405 = vector.broadcast %396 : vector<1x1xf32> to vector<1x128xf32>
    %406 = arith.cmpf oeq, %383, %405 : vector<1x128xf32>
    %407 = vector.broadcast %cst_64 : f32 to vector<1x128xf32>
    %408 = arith.select %406, %130, %407 : vector<1x128xi1>, vector<1x128xf32>
    %cst_127 = arith.constant dense<0x7F800000> : vector<1xf32>
    %409 = vector.multi_reduction <minimumf>, %408, %cst_127 [1] : vector<1x128xf32> to vector<1xf32>
    %410 = vector.shape_cast %409 : vector<1xf32> to vector<1x1xf32>
    %cst_128 = arith.constant dense<0x7F800000> : vector<1xf32>
    %411 = vector.multi_reduction <minimumf>, %410, %cst_128 [0] : vector<1x1xf32> to vector<1xf32>
    %412 = vector.shape_cast %411 : vector<1xf32> to vector<1x1xf32>
    %413 = arith.minimumf %404, %412 : vector<1x1xf32>
    %414 = vector.broadcast %c6_i32_120 : i32 to vector<1x128xi32>
    %415 = arith.cmpi eq, %131, %414 : vector<1x128xi32>
    %416 = vector.shape_cast %396 : vector<1x1xf32> to vector<1x1xf32>
    %417 = vector.broadcast %416 : vector<1x1xf32> to vector<1x128xf32>
    %418 = arith.select %415, %417, %376 : vector<1x128xi1>, vector<1x128xf32>
    %419 = vector.shape_cast %413 : vector<1x1xf32> to vector<1x1xf32>
    %420 = vector.broadcast %419 : vector<1x1xf32> to vector<1x128xf32>
    %421 = arith.select %415, %420, %379 : vector<1x128xi1>, vector<1x128xf32>
    %422 = vector.broadcast %413 : vector<1x1xf32> to vector<1x128xf32>
    %423 = arith.cmpf oeq, %130, %422 : vector<1x128xf32>
    %424 = vector.broadcast %cst_65 : f32 to vector<1x128xf32>
    %425 = arith.select %423, %424, %383 : vector<1x128xi1>, vector<1x128xf32>
    %426 = vector.broadcast %413 : vector<1x1xf32> to vector<1x128xf32>
    %427 = arith.cmpf oeq, %133, %426 : vector<1x128xf32>
    %428 = vector.broadcast %cst_65 : f32 to vector<1x128xf32>
    %429 = arith.select %427, %428, %387 : vector<1x128xi1>, vector<1x128xf32>
    %c7_i32_129 = arith.constant 7 : i32
    %cst_130 = arith.constant dense<0xFF800000> : vector<1xf32>
    %430 = vector.multi_reduction <maximumf>, %425, %cst_130 [1] : vector<1x128xf32> to vector<1xf32>
    %431 = vector.shape_cast %430 : vector<1xf32> to vector<1x1xf32>
    %cst_131 = arith.constant dense<0xFF800000> : vector<1xf32>
    %432 = vector.multi_reduction <maximumf>, %431, %cst_131 [0] : vector<1x1xf32> to vector<1xf32>
    %433 = vector.shape_cast %432 : vector<1xf32> to vector<1x1xf32>
    %cst_132 = arith.constant dense<0xFF800000> : vector<1xf32>
    %434 = vector.multi_reduction <maximumf>, %429, %cst_132 [1] : vector<1x128xf32> to vector<1xf32>
    %435 = vector.shape_cast %434 : vector<1xf32> to vector<1x1xf32>
    %cst_133 = arith.constant dense<0xFF800000> : vector<1xf32>
    %436 = vector.multi_reduction <maximumf>, %435, %cst_133 [0] : vector<1x1xf32> to vector<1xf32>
    %437 = vector.shape_cast %436 : vector<1xf32> to vector<1x1xf32>
    %438 = arith.maximumf %433, %437 : vector<1x1xf32>
    %439 = vector.broadcast %438 : vector<1x1xf32> to vector<1x128xf32>
    %440 = arith.cmpf oeq, %429, %439 : vector<1x128xf32>
    %441 = vector.broadcast %cst_64 : f32 to vector<1x128xf32>
    %442 = arith.select %440, %133, %441 : vector<1x128xi1>, vector<1x128xf32>
    %cst_134 = arith.constant dense<0x7F800000> : vector<1xf32>
    %443 = vector.multi_reduction <minimumf>, %442, %cst_134 [1] : vector<1x128xf32> to vector<1xf32>
    %444 = vector.shape_cast %443 : vector<1xf32> to vector<1x1xf32>
    %cst_135 = arith.constant dense<0x7F800000> : vector<1xf32>
    %445 = vector.multi_reduction <minimumf>, %444, %cst_135 [0] : vector<1x1xf32> to vector<1xf32>
    %446 = vector.shape_cast %445 : vector<1xf32> to vector<1x1xf32>
    %447 = vector.broadcast %438 : vector<1x1xf32> to vector<1x128xf32>
    %448 = arith.cmpf oeq, %425, %447 : vector<1x128xf32>
    %449 = vector.broadcast %cst_64 : f32 to vector<1x128xf32>
    %450 = arith.select %448, %130, %449 : vector<1x128xi1>, vector<1x128xf32>
    %cst_136 = arith.constant dense<0x7F800000> : vector<1xf32>
    %451 = vector.multi_reduction <minimumf>, %450, %cst_136 [1] : vector<1x128xf32> to vector<1xf32>
    %452 = vector.shape_cast %451 : vector<1xf32> to vector<1x1xf32>
    %cst_137 = arith.constant dense<0x7F800000> : vector<1xf32>
    %453 = vector.multi_reduction <minimumf>, %452, %cst_137 [0] : vector<1x1xf32> to vector<1xf32>
    %454 = vector.shape_cast %453 : vector<1xf32> to vector<1x1xf32>
    %455 = arith.minimumf %446, %454 : vector<1x1xf32>
    %456 = vector.broadcast %c7_i32_129 : i32 to vector<1x128xi32>
    %457 = arith.cmpi eq, %131, %456 : vector<1x128xi32>
    %458 = vector.shape_cast %438 : vector<1x1xf32> to vector<1x1xf32>
    %459 = vector.broadcast %458 : vector<1x1xf32> to vector<1x128xf32>
    %460 = arith.select %457, %459, %418 : vector<1x128xi1>, vector<1x128xf32>
    %461 = vector.shape_cast %455 : vector<1x1xf32> to vector<1x1xf32>
    %462 = vector.broadcast %461 : vector<1x1xf32> to vector<1x128xf32>
    %463 = arith.select %457, %462, %421 : vector<1x128xi1>, vector<1x128xf32>
    %464 = vector.broadcast %455 : vector<1x1xf32> to vector<1x128xf32>
    %465 = arith.cmpf oeq, %130, %464 : vector<1x128xf32>
    %466 = vector.broadcast %cst_65 : f32 to vector<1x128xf32>
    %467 = arith.select %465, %466, %425 : vector<1x128xi1>, vector<1x128xf32>
    %468 = vector.broadcast %455 : vector<1x1xf32> to vector<1x128xf32>
    %469 = arith.cmpf oeq, %133, %468 : vector<1x128xf32>
    %470 = vector.broadcast %cst_65 : f32 to vector<1x128xf32>
    %471 = arith.select %469, %470, %429 : vector<1x128xi1>, vector<1x128xf32>
    %c8_i32_138 = arith.constant 8 : i32
    %c0_139 = arith.constant 0 : index
    %c0_140 = arith.constant 0 : index
    %472 = vector.load %arg6[%c0_139, %c0_140] : memref<1x128xf32, #tpu.memory_space<vmem>>, vector<1x128xf32>
    tpu.vector_store %arg6[%c0_139, %c0_140], %460 {strides = array<i32>} : memref<1x128xf32, #tpu.memory_space<vmem>>, vector<1x128xf32>,
    %c0_141 = arith.constant 0 : index
    %c0_142 = arith.constant 0 : index
    %473 = vector.load %arg7[%c0_141, %c0_142] : memref<1x128xf32, #tpu.memory_space<vmem>>, vector<1x128xf32>
    tpu.vector_store %arg7[%c0_141, %c0_142], %463 {strides = array<i32>} : memref<1x128xf32, #tpu.memory_space<vmem>>, vector<1x128xf32>,
    %c0_i32_143 = arith.constant 0 : i32
    %474 = arith.cmpi eq, %arg1, %c0_i32_143 : i32
    %475 = arith.extui %474 : i1 to i32
    %c0_i32_144 = arith.constant 0 : i32
    %476 = arith.cmpi ne, %475, %c0_i32_144 : i32
    scf.if %476 {
      %c0_145 = arith.constant 0 : index
      %c0_146 = arith.constant 0 : index
      %477 = vector.load %arg6[%c0_145, %c0_146] : memref<1x128xf32, #tpu.memory_space<vmem>>, vector<1x128xf32>
      %c0_147 = arith.constant 0 : index
      %c0_148 = arith.constant 0 : index
      %c0_149 = arith.constant 0 : index
      %478 = vector.load %arg3[%c0_147, %c0_148, %c0_149] : memref<1x1x128xf32, #tpu.memory_space<vmem>>, vector<1x1x128xf32>
      %479 = vector.shape_cast %478 : vector<1x1x128xf32> to vector<1x128xf32>
      %480 = vector.shape_cast %477 : vector<1x128xf32> to vector<1x1x128xf32>
      tpu.vector_store %arg3[%c0_147, %c0_148, %c0_149], %480 {strides = array<i32>} : memref<1x1x128xf32, #tpu.memory_space<vmem>>, vector<1x1x128xf32>,
      %c0_150 = arith.constant 0 : index
      %c0_151 = arith.constant 0 : index
      %481 = vector.load %arg7[%c0_150, %c0_151] : memref<1x128xf32, #tpu.memory_space<vmem>>, vector<1x128xf32>
      %c0_152 = arith.constant 0 : index
      %c0_153 = arith.constant 0 : index
      %c0_154 = arith.constant 0 : index
      %482 = vector.load %arg4[%c0_152, %c0_153, %c0_154] : memref<1x1x128xf32, #tpu.memory_space<vmem>>, vector<1x1x128xf32>
      %483 = vector.shape_cast %482 : vector<1x1x128xf32> to vector<1x128xf32>
      %484 = vector.shape_cast %481 : vector<1x128xf32> to vector<1x1x128xf32>
      tpu.vector_store %arg4[%c0_152, %c0_153, %c0_154], %484 {strides = array<i32>} : memref<1x1x128xf32, #tpu.memory_space<vmem>>, vector<1x1x128xf32>,
    } else {
    }
    return
  }
  func.func @transform_0(%arg0: i32, %arg1: i32) -> (i32, i32, i32, i32) {
    %c0_i32 = arith.constant 0 : i32
    %c0_i32_0 = arith.constant 0 : i32
    %c0_i32_1 = arith.constant 0 : i32
    return %arg0, %c0_i32, %arg1, %c0_i32_0 : i32, i32, i32, i32
  }
  func.func @transform_1(%arg0: i32, %arg1: i32) -> (i32, i32, i32) {
    %c0_i32 = arith.constant 0 : i32
    %c0_i32_0 = arith.constant 0 : i32
    %c0_i32_1 = arith.constant 0 : i32
    return %arg0, %c0_i32, %c0_i32_0 : i32, i32, i32
  }
  func.func @transform_2(%arg0: i32, %arg1: i32) -> (i32, i32, i32) {
    %c0_i32 = arith.constant 0 : i32
    %c0_i32_0 = arith.constant 0 : i32
    %c0_i32_1 = arith.constant 0 : i32
    return %arg0, %c0_i32, %c0_i32_0 : i32, i32, i32
  }
  func.func @transform_3(%arg0: i32, %arg1: i32) -> (i32, i32, i32) {
    %c0_i32 = arith.constant 0 : i32
    %c0_i32_0 = arith.constant 0 : i32
    return %arg0, %arg1, %c0_i32 : i32, i32, i32
  }
}

</mosaic_0001>

<llo_original>
// kernel: tpu_custom_call.1
$region0: #{tpu_custom_call.1}
  #allocation0 [shape = 'u32[]', space=smem, size = 0x4, offset = 0x4, fixed_abs, tag = 'smem constant byte address 0x4 - core index']
  #allocation1 [shape = 'u32[144,128]{1,0:T(1,128)}', space=vmem, size = 0x12000, scoped, tag = 'internal scratch']
  #allocation2 [shape = 'f32[1,128]{1,0:T(1,128)}', space=vmem, size = 0x200, scoped, tag = 'scratch operand']
  #allocation3 [shape = 'f32[1,128]{1,0:T(1,128)}', space=vmem, size = 0x200, scoped, tag = 'scratch operand']
  %s0 = inlined_call_operand.hbm [shape: f32[2,16,1,128], index: 0, kind: input, shape index: {}]
  %s1 = inlined_call_operand.hbm [shape: f32[2,1,128], index: 1, kind: output, shape index: {0}]
  %s2 = inlined_call_operand.hbm [shape: f32[2,1,128], index: 2, kind: output, shape index: {1}]
  %s3 = inlined_call_operand.hbm [shape: f32[2,1,128], index: 3, kind: output, shape index: {2}]
  %4 = xla_tuple %s1, %s2, %s3
  %s5 = sld [smem:[#allocation0]]
  $region65: #{tpu_custom_call.1} parent=0
    _
  %s7 = ssub.s32 1, %s5
  %s8 = scalar_select 0, %s7, %s5
  $region1: #{tpu_custom_call.1} parent=0
    #allocation4 [shape = 'u8[16384]{0}', space=vmem, size = 0x4000, scoped, tag = 'input window, operand 0']
    #allocation5 [shape = 's32[2]{0}', space=sflag, size = 0x8, scoped, tag = 'scoped memory for tpu_custom_call.1']
    #allocation6 [shape = 's32[2]{0}', space=sflag, size = 0x8, scoped, tag = 'scoped memory for tpu_custom_call.1']
    #allocation7 [shape = 'u8[1024]{0}', space=vmem, size = 0x400, scoped, tag = 'output window, operand 0']
    #allocation8 [shape = 'u8[1024]{0}', space=vmem, size = 0x400, scoped, tag = 'output window, operand 1']
    #allocation9 [shape = 's32[2]{0}', space=sflag, size = 0x8, scoped, tag = 'scoped memory for tpu_custom_call.1']
    #allocation10 [shape = 'u8[1024]{0}', space=vmem, size = 0x400, scoped, tag = 'output window, operand 2']
    %9 = vsyncpa [#allocation5], 0
    %s10 = scalar_lea.sflag [#allocation5], 1
    %11 = vsyncpa %s10, 0
    %12 = vsyncpa [#allocation6], 0
    %s13 = scalar_lea.sflag [#allocation6], 1
    %14 = vsyncpa %s13, 0
    %15 = vsyncpa [#allocation9], 0
    %s16 = scalar_lea.sflag [#allocation9], 1
    %17 = vsyncpa %s16, 0
    loop: start=0, step=1, limit=4
    $region2: #{tpu_custom_call.1} parent=1 // loop_pre_header
      _
    $region3: #{tpu_custom_call.1} parent=1 // loop_header
      %s19 = sphi 0, %s23
      %p20 = scmp.ge.s32.totalorder %s19, 4
      %s26 = sphi 0, %s38
      %s27 = sphi 0, %s34
      %s28 = sphi 0, %s26
      %s29 = sphi 0, %s27
      %s30 = sphi 0, %s28
      %s31 = sphi 0, %s29
      %s43 = sphi 0, %s45
      %s46 = sphi 0, %s43
      %s47 = sphi 0, %s46
      %s63 = sphi 0, %s47
      %s69 = sphi 0, %s71
      %s72 = sphi 0, %s69
      %s73 = sphi 0, %s72
      %s89 = sphi 0, %s73
      %s95 = sphi 0, %s97
      %s98 = sphi 0, %s95
      %s99 = sphi 0, %s98
      %s115 = sphi 0, %s99
      %s123 = sphi 0, %s125
      %s126 = sphi 0, %s123
      %s127 = sphi 0, %s126
      %s143 = sphi 0, %s127
    $region4: #{tpu_custom_call.1} parent=1 // loop_header_branch
      %22 = sbr.rel (%p20) target = $region8
    $region5: #{tpu_custom_call.1} parent=1 // loop_body
      %s24 = ssub.s32 %s19, 1
      %s25 = ssub.s32 %s19, 2
      %s32 = sadd.s32 1, %s27
      %p33 = scmp.ge.s32.totalorder %s32, 1
      %s34 = scalar_select %p33, 0, %s32
      %s35 = sadd.s32 1, %s26
      %s36 = scalar_select %p33, %s35, %s26
      %p37 = scmp.ge.s32.totalorder %s36, 2
      %s38 = scalar_select %p37, 0, %s36
      %s39 = ssub.s32 %s26, %s38
      %s40 = ssub.s32 %s27, %s34
      %s41 = sor.u32 %s39, %s40
      %p42 = scmp.eq.s32.totalorder %s41, 0
      %s44 = sadd.s32 %s43, 1
      %s45 = scalar_select %p42, %s43, %s44
      %p48 = pneg %p42
      %p49 = scmp.eq.s32.totalorder %s19, 1
      %p50 = por %p48, %p49
      %p51 = scmp.ne.s32.totalorder %s43, %s46
      %p52 = scmp.eq.s32.totalorder %s19, 0
      %p53 = por %p51, %p52
      %p54 = scmp.ne.s32.totalorder %s43, %s46
      %p55 = scmp.eq.s32.totalorder %s24, 1
      %p56 = por %p54, %p55
      %p57 = scmp.ne.s32.totalorder %s46, %s47
      %p58 = scmp.eq.s32.totalorder %s24, 0
      %p59 = por %p57, %p58
      %p60 = scmp.ne.s32.totalorder %s46, %s47
      %p61 = scmp.eq.s32.totalorder %s25, 1
      %p62 = por %p60, %p61
      %p64 = scmp.ne.s32.totalorder %s47, %s63
      %p65 = scmp.eq.s32.totalorder %s25, 0
      %p66 = por %p64, %p65
      %s67 = ssub.s32 %s26, %s38
      %p68 = scmp.eq.s32.totalorder %s67, 0
      %s70 = sadd.s32 %s69, 1
      %s71 = scalar_select %p68, %s69, %s70
      %p74 = pneg %p68
      %p75 = scmp.eq.s32.totalorder %s19, 1
      %p76 = por %p74, %p75
      %p77 = scmp.ne.s32.totalorder %s69, %s72
      %p78 = scmp.eq.s32.totalorder %s19, 0
      %p79 = por %p77, %p78
      %p80 = scmp.ne.s32.totalorder %s69, %s72
      %p81 = scmp.eq.s32.totalorder %s24, 1
      %p82 = por %p80, %p81
      %p83 = scmp.ne.s32.totalorder %s72, %s73
      %p84 = scmp.eq.s32.totalorder %s24, 0
      %p85 = por %p83, %p84
      %p86 = scmp.ne.s32.totalorder %s72, %s73
      %p87 = scmp.eq.s32.totalorder %s25, 1
      %p88 = por %p86, %p87
      %p90 = scmp.ne.s32.totalorder %s73, %s89
      %p91 = scmp.eq.s32.totalorder %s25, 0
      %p92 = por %p90, %p91
      %s93 = ssub.s32 %s26, %s38
      %p94 = scmp.eq.s32.totalorder %s93, 0
      %s96 = sadd.s32 %s95, 1
      %s97 = scalar_select %p94, %s95, %s96
      %p100 = pneg %p94
      %p101 = scmp.eq.s32.totalorder %s19, 1
      %p102 = por %p100, %p101
      %p103 = scmp.ne.s32.totalorder %s95, %s98
      %p104 = scmp.eq.s32.totalorder %s19, 0
      %p105 = por %p103, %p104
      %p106 = scmp.ne.s32.totalorder %s95, %s98
      %p107 = scmp.eq.s32.totalorder %s24, 1
      %p108 = por %p106, %p107
      %p109 = scmp.ne.s32.totalorder %s98, %s99
      %p110 = scmp.eq.s32.totalorder %s24, 0
      %p111 = por %p109, %p110
      %p112 = scmp.ne.s32.totalorder %s98, %s99
      %p113 = scmp.eq.s32.totalorder %s25, 1
      %p114 = por %p112, %p113
      %p116 = scmp.ne.s32.totalorder %s99, %s115
      %p117 = scmp.eq.s32.totalorder %s25, 0
      %p118 = por %p116, %p117
      %s119 = ssub.s32 %s26, %s38
      %s120 = ssub.s32 %s27, %s34
      %s121 = sor.u32 %s119, %s120
      %p122 = scmp.eq.s32.totalorder %s121, 0
      %s124 = sadd.s32 %s123, 1
      %s125 = scalar_select %p122, %s123, %s124
      %p128 = pneg %p122
      %p129 = scmp.eq.s32.totalorder %s19, 1
      %p130 = por %p128, %p129
      %p131 = scmp.ne.s32.totalorder %s123, %s126
      %p132 = scmp.eq.s32.totalorder %s19, 0
      %p133 = por %p131, %p132
      %p134 = scmp.ne.s32.totalorder %s123, %s126
      %p135 = scmp.eq.s32.totalorder %s24, 1
      %p136 = por %p134, %p135
      %p137 = scmp.ne.s32.totalorder %s126, %s127
      %p138 = scmp.eq.s32.totalorder %s24, 0
      %p139 = por %p137, %p138
      %p140 = scmp.ne.s32.totalorder %s126, %s127
      %p141 = scmp.eq.s32.totalorder %s25, 1
      %p142 = por %p140, %p141
      %p144 = scmp.ne.s32.totalorder %s127, %s143
      %p145 = scmp.eq.s32.totalorder %s25, 0
      %p146 = por %p144, %p145
      %p147 = scmp.le.s32.totalorder 1, %s19
      %p148 = scmp.lt.s32.totalorder %s19, 3
      %p149 = pnand %p147, %p148
      %p150 = pneg %p149
      // Predicated region
      $region9: #{tpu_custom_call.1} parent=5 // pred_check
        _
      $region10: #{tpu_custom_call.1} parent=5 // pred_check_branch
        %152 = sbr.rel (%p149) target = $region12
      $region11: #{tpu_custom_call.1} parent=5 // pred_region
        %s153 = ssub.s32 %s19, 1
      $region12: #{tpu_custom_call.1} parent=5 // pred_fallthru
        _
      %p154 = scmp.lt.s32.totalorder %s19, 2
      // Predicated region
      $region13: #{tpu_custom_call.1} parent=5 // pred_check
        %p155 = pneg %p154
      $region14: #{tpu_custom_call.1} parent=5 // pred_check_branch
        %157 = sbr.rel (%p155) target = $region16
      $region15: #{tpu_custom_call.1} parent=5 // pred_region
        // Predicated region
        $region17: #{tpu_custom_call.1} parent=15 // pred_check
          %p158 = pneg %p53
        $region18: #{tpu_custom_call.1} parent=15 // pred_check_branch
          %160 = sbr.rel (%p158) target = $region20
        $region19: #{tpu_custom_call.1} parent=15 // pred_region
          %s161 = sand.u32 %s43, 1
          %s162 = scalar_lea.sflag [#allocation5], %s161
          %s163 = sand.u32 %s43, 1
          %s164 = smul.addr %s163, 16
          %s165 = scalar_lea.vmem [#allocation4], %s164
          %s167 = ssub.s32 256, 256
          %168 = vsyncadd %s162, %s167
          %s169 = smul.addr %s26, 16
          %s170 = sadd.s32 %s27, %s169
          %s171 = smul.addr %s170, 16
          %s172 = scalar_lea.hbm %s0, %s171
          %s173 = sshll.u32 %s165, 4
          %s174 = int_to_ptr.vmem [resolvable:$true] %s173
          %179 = dma.hbm_to_vmem [thread:$0]  %s172, 256, %s174, %s162, 16, 16, 1
        $region20: #{tpu_custom_call.1} parent=15 // pred_fallthru
          _
      $region16: #{tpu_custom_call.1} parent=5 // pred_fallthru
        _
      %p180 = scmp.le.s32.totalorder 1, %s19
      %p181 = scmp.lt.s32.totalorder %s19, 3
      %p182 = pnand %p180, %p181
      %p183 = pneg %p182
      // Predicated region
      $region21: #{tpu_custom_call.1} parent=5 // pred_check
        _
      $region22: #{tpu_custom_call.1} parent=5 // pred_check_branch
        %185 = sbr.rel (%p182) target = $region24
      $region23: #{tpu_custom_call.1} parent=5 // pred_region
        %s186 = ssub.s32 %s19, 1
        %s187 = sand.u32 %s46, 1
        %s188 = scalar_lea.sflag [#allocation5], %s187
        %s189 = sand.u32 %s46, 1
        %s190 = smul.addr %s189, 16
        %s191 = scalar_lea.vmem [#allocation4], %s190
        // Predicated region
        $region25: #{tpu_custom_call.1} parent=23 // pred_check
          %p192 = pneg %p59
        $region26: #{tpu_custom_call.1} parent=23 // pred_check_branch
          %194 = sbr.rel (%p192) target = $region28
        $region27: #{tpu_custom_call.1} parent=23 // pred_region
          %195 = dma.done %s188, 256
        $region28: #{tpu_custom_call.1} parent=23 // pred_fallthru
          _
        %s196 = sand.u32 %s46, 1
        %s197 = scalar_lea.sflag [#allocation5], %s196
        %s198 = sand.u32 %s46, 1
        %s199 = smul.addr %s198, 16
        %s200 = scalar_lea.vmem [#allocation4], %s199
        %p201 = pneg %p59
        %p202 = pneg %p56
        %p203 = pneg %p85
        %p204 = pneg %p82
        %s205 = sand.u32 %s72, 1
        %s206 = scalar_lea.sflag [#allocation6], %s205
        %s207 = sand.u32 %s72, 1
        %s208 = scalar_lea.vmem [#allocation7], %s207
        %p209 = pneg %p111
        %p210 = pneg %p108
        %s211 = sand.u32 %s24, 1
        %s212 = scalar_lea.sflag [#allocation9], %s211
        %s213 = sand.u32 %s98, 1
        %s214 = scalar_lea.vmem [#allocation8], %s213
        %p215 = pneg %p139
        %p216 = pneg %p136
        %s217 = sand.u32 %s24, 1
        %s218 = scalar_lea.sflag [#allocation9], %s217
        %s219 = sand.u32 %s126, 1
        %s220 = scalar_lea.vmem [#allocation10], %s219
        %p221 = scmp.eq.s32.totalorder %s29, 0
        // Predicated region
        $region29: #{tpu_custom_call.1} parent=23 // pred_check
          %p222 = pneg %p221
        $region30: #{tpu_custom_call.1} parent=23 // pred_check_branch
          %224 = sbr.rel (%p222) target = $region32
        $region31: #{tpu_custom_call.1} parent=23 // pred_region
          %225 = vst [vmem:[#allocation2] sm:$0x1] -inf
          %226 = vst [vmem:[#allocation3] sm:$0x1] -1.0
        $region32: #{tpu_custom_call.1} parent=23 // pred_fallthru
          _
        %v227 = vld [vmem:[%s191] sm:$0x1]
        %s228 = scalar_lea.vmem %s191, 1 [#allocation4]
        %v229 = vld [vmem:[%s228] sm:$0x1]
        %vm230 = vcmp.gt.f32.partialorder %v229, %v227
        %v231 = vsel %vm230, %v229, %v227
        %v232 = vsel %vm230, 1, 0
        %s233 = scalar_lea.vmem %s191, 2 [#allocation4]
        %v234 = vld [vmem:[%s233] sm:$0x1]
        %vm235 = vcmp.gt.f32.partialorder %v234, %v231
        %v236 = vsel %vm235, %v234, %v231
        %v237 = vsel %vm235, 2, %v232
        %s238 = scalar_lea.vmem %s191, 3 [#allocation4]
        %v239 = vld [vmem:[%s238] sm:$0x1]
        %vm240 = vcmp.gt.f32.partialorder %v239, %v236
        %v241 = vsel %vm240, %v239, %v236
        %v242 = vsel %vm240, 3, %v237
        %s243 = scalar_lea.vmem %s191, 4 [#allocation4]
        %v244 = vld [vmem:[%s243] sm:$0x1]
        %vm245 = vcmp.gt.f32.partialorder %v244, %v241
        %v246 = vsel %vm245, %v244, %v241
        %v247 = vsel %vm245, 4, %v242
        %s248 = scalar_lea.vmem %s191, 5 [#allocation4]
        %v249 = vld [vmem:[%s248] sm:$0x1]
        %vm250 = vcmp.gt.f32.partialorder %v249, %v246
        %v251 = vsel %vm250, %v249, %v246
        %v252 = vsel %vm250, 5, %v247
        %s253 = scalar_lea.vmem %s191, 6 [#allocation4]
        %v254 = vld [vmem:[%s253] sm:$0x1]
        %vm255 = vcmp.gt.f32.partialorder %v254, %v251
        %v256 = vsel %vm255, %v254, %v251
        %v257 = vsel %vm255, 6, %v252
        %s258 = scalar_lea.vmem %s191, 7 [#allocation4]
        %v259 = vld [vmem:[%s258] sm:$0x1]
        %vm260 = vcmp.gt.f32.partialorder %v259, %v256
        %v261 = vsel %vm260, %v259, %v256
        %v262 = vsel %vm260, 7, %v257
        %s263 = scalar_lea.vmem %s191, 8 [#allocation4]
        %v264 = vld [vmem:[%s263] sm:$0x1]
        %vm265 = vcmp.gt.f32.partialorder %v264, %v261
        %v266 = vsel %vm265, %v264, %v261
        %v267 = vsel %vm265, 8, %v262
        %s268 = scalar_lea.vmem %s191, 9 [#allocation4]
        %v269 = vld [vmem:[%s268] sm:$0x1]
        %vm270 = vcmp.gt.f32.partialorder %v269, %v266
        %v271 = vsel %vm270, %v269, %v266
        %v272 = vsel %vm270, 9, %v267
        %s273 = scalar_lea.vmem %s191, 10 [#allocation4]
        %v274 = vld [vmem:[%s273] sm:$0x1]
        %vm275 = vcmp.gt.f32.partialorder %v274, %v271
        %v276 = vsel %vm275, %v274, %v271
        %v277 = vsel %vm275, 10, %v272
        %s278 = scalar_lea.vmem %s191, 11 [#allocation4]
        %v279 = vld [vmem:[%s278] sm:$0x1]
        %vm280 = vcmp.gt.f32.partialorder %v279, %v276
        %v281 = vsel %vm280, %v279, %v276
        %v282 = vsel %vm280, 11, %v277
        %s283 = scalar_lea.vmem %s191, 12 [#allocation4]
        %v284 = vld [vmem:[%s283] sm:$0x1]
        %vm285 = vcmp.gt.f32.partialorder %v284, %v281
        %v286 = vsel %vm285, %v284, %v281
        %v287 = vsel %vm285, 12, %v282
        %s288 = scalar_lea.vmem %s191, 13 [#allocation4]
        %v289 = vld [vmem:[%s288] sm:$0x1]
        %vm290 = vcmp.gt.f32.partialorder %v289, %v286
        %v291 = vsel %vm290, %v289, %v286
        %v292 = vsel %vm290, 13, %v287
        %s293 = scalar_lea.vmem %s191, 14 [#allocation4]
        %v294 = vld [vmem:[%s293] sm:$0x1]
        %vm295 = vcmp.gt.f32.partialorder %v294, %v291
        %v296 = vsel %vm295, %v294, %v291
        %v297 = vsel %vm295, 14, %v292
        %s298 = scalar_lea.vmem %s191, 15 [#allocation4]
        %v299 = vld [vmem:[%s298] sm:$0x1]
        %vm300 = vcmp.gt.f32.partialorder %v299, %v296
        %v301 = vsel %vm300, %v299, %v296
        %v302 = vsel %vm300, 15, %v297
        %v303 = vcvt.s32.f32 %v302
        %304 = vst [vmem:[%s220] sm:$0x1] %v303
        %v305 = vlaneseq
        %v306 = vshrl.u32 %v305, 7
        %v307 = vlaneseq
        %v308 = vand.u32 %v307, 127
        %s309 = smul.u32 %s29, 128
        %v310 = vmul.u32 %v306, 128
        %v311 = vstv %s309
        %v312 = vadd.s32 %v311, %v310
        %v313 = vadd.s32 %v312, %v308
        %vm314 = vcmp.lt.s32.totalorder %v313, 128
        %vm315 = vcmp.ne.f32.partialorder %v301, %v301
        %vm316 = vmxor %vm315, 1
        %vm317 = vmand %vm314, %vm316
        %v318 = vsel %vm317, %v301, -inf
        %v319 = vcvt.s32.f32 %v313
        %v320 = vld [vmem:[#allocation2] sm:$0x1]
        %v321 = vld [vmem:[#allocation3] sm:$0x1]
        %vm322 = vcmask 1040384
        %v323 = vsel %vm322, %v318, -inf
        %324 = vmax.xlane.f32.xlu0 %v323
        %v325 = vpop.xlane.xlu0 %324
        %v326 = vsel %vm322, %v320, -inf
        %327 = vmax.xlane.f32.xlu0 %v326
        %v328 = vpop.xlane.xlu0 %327
        %v329 = vmax.f32 %v325, %v328
        %vm330 = vcmp.eq.f32.partialorder %v320, %v329
        %v331 = vsel %vm330, %v321, inf
        %v332 = vsel %vm322, %v331, inf
        %333 = vmin.xlane.f32.xlu0 %v332
        %v334 = vpop.xlane.xlu0 %333
        %vm335 = vcmp.eq.f32.partialorder %v318, %v329
        %v336 = vsel %vm335, %v319, inf
        %v337 = vsel %vm322, %v336, inf
        %338 = vmin.xlane.f32.xlu0 %v337
        %v339 = vpop.xlane.xlu0 %338
        %v340 = vmin.f32 %v334, %v339
        %vm341 = vcmp.eq.s32.totalorder %v308, 0
        %v342 = vsel %vm341, %v329, -inf
        %v343 = vsel %vm341, %v340, -1.0
        %vm344 = vcmp.eq.f32.partialorder %v319, %v340
        %v345 = vsel %vm344, -inf, %v318
        %vm346 = vcmp.eq.f32.partialorder %v321, %v340
        %v347 = vsel %vm346, -inf, %v320
        %v348 = vsel %vm322, %v345, -inf
        %349 = vmax.xlane.f32.xlu0 %v348
        %v350 = vpop.xlane.xlu0 %349
        %v351 = vsel %vm322, %v347, -inf
        %352 = vmax.xlane.f32.xlu0 %v351
        %v353 = vpop.xlane.xlu0 %352
        %v354 = vmax.f32 %v350, %v353
        %vm355 = vcmp.eq.f32.partialorder %v347, %v354
        %v356 = vsel %vm355, %v321, inf
        %v357 = vsel %vm322, %v356, inf
        %358 = vmin.xlane.f32.xlu0 %v357
        %v359 = vpop.xlane.xlu0 %358
        %vm360 = vcmp.eq.f32.partialorder %v345, %v354
        %v361 = vsel %vm360, %v319, inf
        %v362 = vsel %vm322, %v361, inf
        %363 = vmin.xlane.f32.xlu0 %v362
        %v364 = vpop.xlane.xlu0 %363
        %v365 = vmin.f32 %v359, %v364
        %vm366 = vcmp.eq.s32.totalorder %v308, 1
        %v367 = vsel %vm366, %v354, %v342
        %v368 = vsel %vm366, %v365, %v343
        %vm369 = vcmp.eq.f32.partialorder %v319, %v365
        %v370 = vsel %vm369, -inf, %v345
        %vm371 = vcmp.eq.f32.partialorder %v321, %v365
        %v372 = vsel %vm371, -inf, %v347
        %v373 = vsel %vm322, %v370, -inf
        %374 = vmax.xlane.f32.xlu0 %v373
        %v375 = vpop.xlane.xlu0 %374
        %v376 = vsel %vm322, %v372, -inf
        %377 = vmax.xlane.f32.xlu0 %v376
        %v378 = vpop.xlane.xlu0 %377
        %v379 = vmax.f32 %v375, %v378
        %vm380 = vcmp.eq.f32.partialorder %v372, %v379
        %v381 = vsel %vm380, %v321, inf
        %v382 = vsel %vm322, %v381, inf
        %383 = vmin.xlane.f32.xlu0 %v382
        %v384 = vpop.xlane.xlu0 %383
        %vm385 = vcmp.eq.f32.partialorder %v370, %v379
        %v386 = vsel %vm385, %v319, inf
        %v387 = vsel %vm322, %v386, inf
        %388 = vmin.xlane.f32.xlu0 %v387
        %v389 = vpop.xlane.xlu0 %388
        %v390 = vmin.f32 %v384, %v389
        %vm391 = vcmp.eq.s32.totalorder %v308, 2
        %v392 = vsel %vm391, %v379, %v367
        %v393 = vsel %vm391, %v390, %v368
        %vm394 = vcmp.eq.f32.partialorder %v319, %v390
        %v395 = vsel %vm394, -inf, %v370
        %vm396 = vcmp.eq.f32.partialorder %v321, %v390
        %v397 = vsel %vm396, -inf, %v372
        %v398 = vsel %vm322, %v395, -inf
        %399 = vmax.xlane.f32.xlu0 %v398
        %v400 = vpop.xlane.xlu0 %399
        %v401 = vsel %vm322, %v397, -inf
        %402 = vmax.xlane.f32.xlu0 %v401
        %v403 = vpop.xlane.xlu0 %402
        %v404 = vmax.f32 %v400, %v403
        %vm405 = vcmp.eq.f32.partialorder %v397, %v404
        %v406 = vsel %vm405, %v321, inf
        %v407 = vsel %vm322, %v406, inf
        %408 = vmin.xlane.f32.xlu0 %v407
        %v409 = vpop.xlane.xlu0 %408
        %vm410 = vcmp.eq.f32.partialorder %v395, %v404
        %v411 = vsel %vm410, %v319, inf
        %v412 = vsel %vm322, %v411, inf
        %413 = vmin.xlane.f32.xlu0 %v412
        %v414 = vpop.xlane.xlu0 %413
        %v415 = vmin.f32 %v409, %v414
        %vm416 = vcmp.eq.s32.totalorder %v308, 3
        %v417 = vsel %vm416, %v404, %v392
        %v418 = vsel %vm416, %v415, %v393
        %vm419 = vcmp.eq.f32.partialorder %v319, %v415
        %v420 = vsel %vm419, -inf, %v395
        %vm421 = vcmp.eq.f32.partialorder %v321, %v415
        %v422 = vsel %vm421, -inf, %v397
        %v423 = vsel %vm322, %v420, -inf
        %424 = vmax.xlane.f32.xlu0 %v423
        %v425 = vpop.xlane.xlu0 %424
        %v426 = vsel %vm322, %v422, -inf
        %427 = vmax.xlane.f32.xlu0 %v426
        %v428 = vpop.xlane.xlu0 %427
        %v429 = vmax.f32 %v425, %v428
        %vm430 = vcmp.eq.f32.partialorder %v422, %v429
        %v431 = vsel %vm430, %v321, inf
        %v432 = vsel %vm322, %v431, inf
        %433 = vmin.xlane.f32.xlu0 %v432
        %v434 = vpop.xlane.xlu0 %433
        %vm435 = vcmp.eq.f32.partialorder %v420, %v429
        %v436 = vsel %vm435, %v319, inf
        %v437 = vsel %vm322, %v436, inf
        %438 = vmin.xlane.f32.xlu0 %v437
        %v439 = vpop.xlane.xlu0 %438
        %v440 = vmin.f32 %v434, %v439
        %vm441 = vcmp.eq.s32.totalorder %v308, 4
        %v442 = vsel %vm441, %v429, %v417
        %v443 = vsel %vm441, %v440, %v418
        %vm444 = vcmp.eq.f32.partialorder %v319, %v440
        %v445 = vsel %vm444, -inf, %v420
        %vm446 = vcmp.eq.f32.partialorder %v321, %v440
        %v447 = vsel %vm446, -inf, %v422
        %v448 = vsel %vm322, %v445, -inf
        %449 = vmax.xlane.f32.xlu0 %v448
        %v450 = vpop.xlane.xlu0 %449
        %v451 = vsel %vm322, %v447, -inf
        %452 = vmax.xlane.f32.xlu0 %v451
        %v453 = vpop.xlane.xlu0 %452
        %v454 = vmax.f32 %v450, %v453
        %vm455 = vcmp.eq.f32.partialorder %v447, %v454
        %v456 = vsel %vm455, %v321, inf
        %v457 = vsel %vm322, %v456, inf
        %458 = vmin.xlane.f32.xlu0 %v457
        %v459 = vpop.xlane.xlu0 %458
        %vm460 = vcmp.eq.f32.partialorder %v445, %v454
        %v461 = vsel %vm460, %v319, inf
        %v462 = vsel %vm322, %v461, inf
        %463 = vmin.xlane.f32.xlu0 %v462
        %v464 = vpop.xlane.xlu0 %463
        %v465 = vmin.f32 %v459, %v464
        %vm466 = vcmp.eq.s32.totalorder %v308, 5
        %v467 = vsel %vm466, %v454, %v442
        %v468 = vsel %vm466, %v465, %v443
        %vm469 = vcmp.eq.f32.partialorder %v319, %v465
        %v470 = vsel %vm469, -inf, %v445
        %vm471 = vcmp.eq.f32.partialorder %v321, %v465
        %v472 = vsel %vm471, -inf, %v447
        %v473 = vsel %vm322, %v470, -inf
        %474 = vmax.xlane.f32.xlu0 %v473
        %v475 = vpop.xlane.xlu0 %474
        %v476 = vsel %vm322, %v472, -inf
        %477 = vmax.xlane.f32.xlu0 %v476
        %v478 = vpop.xlane.xlu0 %477
        %v479 = vmax.f32 %v475, %v478
        %vm480 = vcmp.eq.f32.partialorder %v472, %v479
        %v481 = vsel %vm480, %v321, inf
        %v482 = vsel %vm322, %v481, inf
        %483 = vmin.xlane.f32.xlu0 %v482
        %v484 = vpop.xlane.xlu0 %483
        %vm485 = vcmp.eq.f32.partialorder %v470, %v479
        %v486 = vsel %vm485, %v319, inf
        %v487 = vsel %vm322, %v486, inf
        %488 = vmin.xlane.f32.xlu0 %v487
        %v489 = vpop.xlane.xlu0 %488
        %v490 = vmin.f32 %v484, %v489
        %vm491 = vcmp.eq.s32.totalorder %v308, 6
        %v492 = vsel %vm491, %v479, %v467
        %v493 = vsel %vm491, %v490, %v468
        %vm494 = vcmp.eq.f32.partialorder %v319, %v490
        %v495 = vsel %vm494, -inf, %v470
        %vm496 = vcmp.eq.f32.partialorder %v321, %v490
        %v497 = vsel %vm496, -inf, %v472
        %v498 = vsel %vm322, %v495, -inf
        %499 = vmax.xlane.f32.xlu0 %v498
        %v500 = vpop.xlane.xlu0 %499
        %v501 = vsel %vm322, %v497, -inf
        %502 = vmax.xlane.f32.xlu0 %v501
        %v503 = vpop.xlane.xlu0 %502
        %v504 = vmax.f32 %v500, %v503
        %vm505 = vcmp.eq.f32.partialorder %v497, %v504
        %v506 = vsel %vm505, %v321, inf
        %v507 = vsel %vm322, %v506, inf
        %508 = vmin.xlane.f32.xlu0 %v507
        %v509 = vpop.xlane.xlu0 %508
        %vm510 = vcmp.eq.f32.partialorder %v495, %v504
        %v511 = vsel %vm510, %v319, inf
        %v512 = vsel %vm322, %v511, inf
        %513 = vmin.xlane.f32.xlu0 %v512
        %v514 = vpop.xlane.xlu0 %513
        %v515 = vmin.f32 %v509, %v514
        %vm516 = vcmp.eq.s32.totalorder %v308, 7
        %v517 = vsel %vm516, %v504, %v492
        %v518 = vsel %vm516, %v515, %v493
        %519 = vst [vmem:[#allocation2] sm:$0x1] %v517
        %520 = vst [vmem:[#allocation3] sm:$0x1] %v518
        // Predicated region
        $region33: #{tpu_custom_call.1} parent=23 // pred_check
          %p521 = pneg %p221
        $region34: #{tpu_custom_call.1} parent=23 // pred_check_branch
          %523 = sbr.rel (%p521) target = $region36
        $region35: #{tpu_custom_call.1} parent=23 // pred_region
          %v524 = vld [vmem:[#allocation2] sm:$0x1]
          %525 = vst [vmem:[%s208] sm:$0x1] %v524
          %v526 = vld [vmem:[#allocation3] sm:$0x1]
          %527 = vst [vmem:[%s214] sm:$0x1] %v526
        $region36: #{tpu_custom_call.1} parent=23 // pred_fallthru
          _
        %s528 = sand.u32 %s72, 1
        %s529 = scalar_lea.sflag [#allocation6], %s528
        %s530 = sand.u32 %s72, 1
        %s531 = scalar_lea.vmem [#allocation7], %s530
        %s532 = sand.u32 %s24, 1
        %s533 = scalar_lea.sflag [#allocation9], %s532
        %s534 = sand.u32 %s98, 1
        %s535 = scalar_lea.vmem [#allocation8], %s534
        %s536 = sand.u32 %s24, 1
        %s537 = scalar_lea.sflag [#allocation9], %s536
        %s538 = sand.u32 %s126, 1
        %s539 = scalar_lea.vmem [#allocation10], %s538
        // Predicated region
        $region37: #{tpu_custom_call.1} parent=23 // pred_check
          %p540 = pneg %p82
        $region38: #{tpu_custom_call.1} parent=23 // pred_check_branch
          %542 = sbr.rel (%p540) target = $region40
        $region39: #{tpu_custom_call.1} parent=23 // pred_region
          %s544 = ssub.s32 16, 16
          %545 = vsyncadd %s529, %s544
          %s546 = smul.addr %s28, 16
          %s547 = scalar_lea.hbm %s1, %s546
          %s549 = sshll.u32 %s531, 4
          %s550 = int_to_ptr.vmem [resolvable:$true] %s549
          %552 = dma.vmem_to_hbm [thread:$0]  %s550, 16, %s547, %s529
        $region40: #{tpu_custom_call.1} parent=23 // pred_fallthru
          _
        // Predicated region
        $region41: #{tpu_custom_call.1} parent=23 // pred_check
          %p553 = pneg %p108
        $region42: #{tpu_custom_call.1} parent=23 // pred_check_branch
          %555 = sbr.rel (%p553) target = $region44
        $region43: #{tpu_custom_call.1} parent=23 // pred_region
          %s557 = ssub.s32 16, 16
          %558 = vsyncadd %s533, %s557
          %s559 = smul.addr %s28, 16
          %s560 = scalar_lea.hbm %s2, %s559
          %s562 = sshll.u32 %s535, 4
          %s563 = int_to_ptr.vmem [resolvable:$true] %s562
          %565 = dma.vmem_to_hbm [thread:$0]  %s563, 16, %s560, %s533
        $region44: #{tpu_custom_call.1} parent=23 // pred_fallthru
          _
        // Predicated region
        $region45: #{tpu_custom_call.1} parent=23 // pred_check
          %p566 = pneg %p136
        $region46: #{tpu_custom_call.1} parent=23 // pred_check_branch
          %568 = sbr.rel (%p566) target = $region48
        $region47: #{tpu_custom_call.1} parent=23 // pred_region
          %s570 = ssub.s32 16, 16
          %571 = vsyncadd %s537, %s570
          %s572 = sadd.s32 %s29, %s28
          %s573 = smul.addr %s572, 16
          %s574 = scalar_lea.hbm %s3, %s573
          %s576 = sshll.u32 %s539, 4
          %s577 = int_to_ptr.vmem [resolvable:$true] %s576
          %579 = dma.vmem_to_hbm [thread:$0]  %s577, 16, %s574, %s537
        $region48: #{tpu_custom_call.1} parent=23 // pred_fallthru
          _
      $region24: #{tpu_custom_call.1} parent=5 // pred_fallthru
        _
      %p580 = scmp.le.s32.totalorder 2, %s19
      // Predicated region
      $region49: #{tpu_custom_call.1} parent=5 // pred_check
        %p581 = pneg %p580
      $region50: #{tpu_custom_call.1} parent=5 // pred_check_branch
        %583 = sbr.rel (%p581) target = $region52
      $region51: #{tpu_custom_call.1} parent=5 // pred_region
        %s584 = ssub.s32 %s19, 2
        // Predicated region
        $region53: #{tpu_custom_call.1} parent=51 // pred_check
          %p585 = pneg %p88
        $region54: #{tpu_custom_call.1} parent=51 // pred_check_branch
          %587 = sbr.rel (%p585) target = $region56
        $region55: #{tpu_custom_call.1} parent=51 // pred_region
          %s588 = sand.u32 %s73, 1
          %s589 = scalar_lea.sflag [#allocation6], %s588
          %s590 = sand.u32 %s73, 1
          %s591 = scalar_lea.vmem [#allocation7], %s590
          %592 = dma.done %s589, 16
        $region56: #{tpu_custom_call.1} parent=51 // pred_fallthru
          _
        // Predicated region
        $region57: #{tpu_custom_call.1} parent=51 // pred_check
          %p593 = pneg %p114
        $region58: #{tpu_custom_call.1} parent=51 // pred_check_branch
          %595 = sbr.rel (%p593) target = $region60
        $region59: #{tpu_custom_call.1} parent=51 // pred_region
          %s596 = sand.u32 %s25, 1
          %s597 = scalar_lea.sflag [#allocation9], %s596
          %s598 = sand.u32 %s99, 1
          %s599 = scalar_lea.vmem [#allocation8], %s598
          %600 = dma.done %s597, 16
        $region60: #{tpu_custom_call.1} parent=51 // pred_fallthru
          _
        // Predicated region
        $region61: #{tpu_custom_call.1} parent=51 // pred_check
          %p601 = pneg %p142
        $region62: #{tpu_custom_call.1} parent=51 // pred_check_branch
          %603 = sbr.rel (%p601) target = $region64
        $region63: #{tpu_custom_call.1} parent=51 // pred_region
          %s604 = sand.u32 %s25, 1
          %s605 = scalar_lea.sflag [#allocation9], %s604
          %s606 = sand.u32 %s127, 1
          %s607 = scalar_lea.vmem [#allocation10], %s606
          %608 = dma.done %s605, 16
        $region64: #{tpu_custom_call.1} parent=51 // pred_fallthru
          _
      $region52: #{tpu_custom_call.1} parent=5 // pred_fallthru
        _
    $region6: #{tpu_custom_call.1} parent=1 // loop_footer
      %s23 = sadd.s32 1, %s19
    $region7: #{tpu_custom_call.1} parent=1 // loop_footer_branch
      %18 = sbr.rel target = $region3
    $region8: #{tpu_custom_call.1} parent=1 // loop_exit
      _
    %609 = vsyncpa [#allocation5], 1
    %s610 = scalar_lea.sflag [#allocation5], 1
    %611 = vsyncpa %s610, 1
    %612 = vsyncpa [#allocation6], 1
    %s613 = scalar_lea.sflag [#allocation6], 1
    %614 = vsyncpa %s613, 1
    %615 = vsyncpa [#allocation9], 1
    %s616 = scalar_lea.sflag [#allocation9], 1
    %617 = vsyncpa %s616, 1

</llo_original>
